<compile_context>
chip_gen: v6e
topology: v6e:2x2x1
jax: 0.10.0
libtpu: 0.0.40
codegen_flags: <defaults>
</compile_context>

<pallas_src>
import numpy as np
import jax
import jax.numpy as jnp
from jax import lax
from jax.experimental import pallas as pl
from jax.experimental.pallas import tpu as pltpu  # noqa: F401  (no grid/scratch needed)

# ---- problem sizes (fixed by the PyTorch module: Linear(180, ...) => L = 56) ----
B = 32                       # example batch
L = 56                       # -> conv1: 23, conv2: 9, conv3: 3 ; 60*3 = 180 feats

K1, C1, S1 = 12, 15, 2
K2, C2, S2 = 7, 30, 2
K3, C3, S3 = 5, 60, 2
T1 = (L - K1) // S1 + 1      # 23
T2 = (T1 - K2) // S2 + 1     # 9
T3 = (T2 - K3) // S3 + 1     # 3
F = C3 * T3                  # 180
H = 100

# padded, lane-friendly feature widths
N1P = 384                    # >= T1*C1 = 345
N2P = 384                    # >= T2*C2 = 270
N3P = 256                    # >= T3*C3 = 180
HP = 128                     # >= H = 100
WBIG_COLS = N2P + N3P + HP   # 768  ( [W2 | W3 | FW1] )


# --------------------------------- kernel -----------------------------------
def convnet_kernel(x_ref, w1_ref, wbig_ref, vec_ref, out_ref):
    # conv1 as one matmul (f32 weights; default MXU precision, f32 accumulate)
    y1 = jnp.dot(x_ref[...], w1_ref[...], preferred_element_type=jnp.float32)
    y1 = jnp.maximum(y1 + vec_ref[0:1, :], 0.0)                         # (B, 384)

    # conv2 (bf16 operands -> native MXU path, f32 accumulate)
    y2 = jnp.dot(y1.astype(jnp.bfloat16), wbig_ref[:, 0:N2P],
                 preferred_element_type=jnp.float32)
    y2 = jnp.maximum(y2 + vec_ref[1:2, :], 0.0)                         # (B, 384)

    # conv3: bias, NO ReLU (matches the PyTorch forward)
    y3 = jnp.dot(y2.astype(jnp.bfloat16), wbig_ref[:, N2P:N2P + N3P],
                 preferred_element_type=jnp.float32)
    y3 = y3 + vec_ref[2:3, 0:N3P]                                       # (B, 256)

    # fc1 (flatten-order permutation already folded into the packed weight)
    h = jnp.dot(y3.astype(jnp.bfloat16), wbig_ref[0:N3P, N2P + N3P:WBIG_COLS],
                preferred_element_type=jnp.float32)
    h = jnp.maximum(h + vec_ref[3:4, 0:HP], 0.0)                        # (B, 128)

    # fc2 (N=1): VPU multiply + XLU lane reduction instead of an MXU pass
    out_ref[...] = (jnp.sum(h * vec_ref[4:5, 0:HP], axis=-1, keepdims=True)
                    + vec_ref[5:6, 0:1])                                # (B, 1)


# -------------------- one-time host-side parameter re-layout -----------------
def _toeplitz_weight(w, t_in, stride, rows_pad, cols_pad):
    """Conv1d weight (C_out, C_in, K) -> dense (rows_pad, cols_pad) matrix acting on
    time-major/channel-minor flattened activations (index = t*C_in + c)."""
    w = np.asarray(w, np.float32)
    c_out, c_in, k_sz = w.shape
    t_out = (t_in - k_sz) // stride + 1
    wt = np.transpose(w, (2, 1, 0))                      # (K, C_in, C_out)
    mat = np.zeros((rows_pad, cols_pad), np.float32)
    for t in range(t_out):
        for k in range(k_sz):
            r = (t * stride + k) * c_in
            c = t * c_out
            mat[r:r + c_in, c:c + c_out] = wt[k]
    return mat


def prepare_params(params):
    """Precompute kernel-layout (Toeplitz, packed, padded) params ONCE; reuse across calls."""
    w1, b1, w2, b2, w3, b3, fw1, fb1, fw2, fb2 = params

    W1 = _toeplitz_weight(w1, L, S1, L, N1P)             # (56, 384)  f32
    W2 = _toeplitz_weight(w2, T1, S2, N1P, N2P)          # (384, 384)
    W3 = _toeplitz_weight(w3, T2, S3, N2P, N3P)          # (384, 256)

    # fc1: PyTorch flattens conv3 output in (channel, time) order; our activations
    # are (time, channel) order, so fold the permutation into the weight.
    fw1_np = np.asarray(fw1, np.float32)                 # (H, F), F index = c*T3 + t
    fw1_perm = np.transpose(fw1_np.reshape(H, C3, T3), (2, 1, 0)).reshape(F, H)
    FW1 = np.zeros((N2P, HP), np.float32)                # 384 rows to co-pack w/ W2,W3
    FW1[:F, :H] = fw1_perm

    # one big lane-aligned bf16 weight buffer: [ W2 | W3 | FW1 ]  -> (384, 768)
    WBIG = np.concatenate([W2, W3, FW1], axis=1)

    # one packed f32 vector buffer: tiled biases (index = t*C + c), fc2 row, fc2 bias
    VEC = np.zeros((8, N1P), np.float32)
    VEC[0, :T1 * C1] = np.tile(np.asarray(b1, np.float32), T1)
    VEC[1, :T2 * C2] = np.tile(np.asarray(b2, np.float32), T2)
    VEC[2, :T3 * C3] = np.tile(np.asarray(b3, np.float32), T3)
    VEC[3, :H] = np.asarray(fb1, np.float32)
    VEC[4, :H] = np.asarray(fw2, np.float32)[0]
    VEC[5, 0] = np.asarray(fb2, np.float32)[0]

    return (jnp.asarray(W1, jnp.float32),
            jnp.asarray(WBIG, jnp.bfloat16),
            jnp.asarray(VEC, jnp.float32))


# --------------------------------- wrapper -----------------------------------
def convnet_forward(x, kparams):
    w1, wbig, vec = kparams
    bsz = x.shape[0]
    # Single invocation, no grid: whole arrays resident in VMEM (~0.7 MiB total),
    # 4 input DMAs, one output write.
    return pl.pallas_call(
        convnet_kernel,
        out_shape=jax.ShapeDtypeStruct((bsz, 1), jnp.float32),
    )(x, w1, wbig, vec)


# -------------------------- init + pure-JAX reference ------------------------
def init_params(key):
    """Deterministic PyTorch-default-style init (uniform +/- 1/sqrt(fan_in))."""
    ks = jax.random.split(key, 10)

    def u(k, shape, fan_in):
        bound = 1.0 / np.sqrt(fan_in)
        return jax.random.uniform(k, shape, jnp.float32, -bound, bound)

    w1 = u(ks[0], (C1, 1, K1), 1 * K1)
    b1 = u(ks[1], (C1,), 1 * K1)
    w2 = u(ks[2], (C2, C1, K2), C1 * K2)
    b2 = u(ks[3], (C2,), C1 * K2)
    w3 = u(ks[4], (C3, C2, K3), C2 * K3)
    b3 = u(ks[5], (C3,), C2 * K3)
    fw1 = u(ks[6], (H, F), F)
    fb1 = u(ks[7], (H,), F)
    fw2 = u(ks[8], (1, H), H)
    fb2 = u(ks[9], (1,), H)
    return (w1, b1, w2, b2, w3, b3, fw1, fb1, fw2, fb2)


def convnet_ref(x, params):
    """Pure-JAX reference matching the PyTorch forward (for correctness check)."""
    w1, b1, w2, b2, w3, b3, fw1, fb1, fw2, fb2 = params
    dn = ('NCH', 'OIH', 'NCH')
    hp = lax.Precision.HIGHEST
    y = x[:, None, :]                                              # (B,1,L)
    y = lax.conv_general_dilated(y, w1, (S1,), 'VALID',
                                 dimension_numbers=dn, precision=hp) + b1[None, :, None]
    y = jnp.maximum(y, 0.0)
    y = lax.conv_general_dilated(y, w2, (S2,), 'VALID',
                                 dimension_numbers=dn, precision=hp) + b2[None, :, None]
    y = jnp.maximum(y, 0.0)
    y = lax.conv_general_dilated(y, w3, (S3,), 'VALID',
                                 dimension_numbers=dn, precision=hp) + b3[None, :, None]
    # TODO(synk): the PyTorch forward has a debug `print(x.size())` here; omitted.
    y = y.reshape(-1, F)                                           # (B, 180), (C,T) order
    y = jnp.maximum(jnp.dot(y, fw1.T, precision=hp) + fb1, 0.0)
    return jnp.dot(y, fw2.T, precision=hp) + fb2


if __name__ == "__main__":
    key = jax.random.PRNGKey(0)
    kx, kp = jax.random.split(key)
    x = jax.random.normal(kx, (B, L), jnp.float32)
    params = init_params(kp)

    # One-time re-layout, hoisted out of the per-call forward path.
    kparams = prepare_params(params)

    fwd = jax.jit(convnet_forward)
    out = jax.block_until_ready(fwd(x, kparams))
    ref = jax.block_until_ready(convnet_ref(x, params))

    assert out.shape == (B, 1), out.shape
    # bf16 weight/activation operands (f32 accumulate) vs HIGHEST-precision reference.
    np.testing.assert_allclose(np.asarray(out), np.asarray(ref),
                               rtol=2e-3, atol=2e-3)
    print("KERNEL_OK")
</pallas_src>

<mosaic_0001>
module attributes {stable_mosaic.version = 11 : i64} {
  func.func @convnet_kernel(%arg0: memref<32x56xf32, #tpu.memory_space<vmem>>, %arg1: memref<56x384xf32, #tpu.memory_space<vmem>>, %arg2: memref<384x768xbf16, #tpu.memory_space<vmem>>, %arg3: memref<8x384xf32, #tpu.memory_space<vmem>>, %arg4: memref<32x1xf32, #tpu.memory_space<vmem>>) attributes {dimension_semantics = [], scalar_prefetch = 0 : i64, scratch_operands = 0 : i64, tpu.core_type = #tpu.core_type<tc>} {
    %c0 = arith.constant 0 : index
    %c0_0 = arith.constant 0 : index
    %0 = vector.load %arg0[%c0, %c0_0] : memref<32x56xf32, #tpu.memory_space<vmem>>, vector<32x56xf32>
    %c0_1 = arith.constant 0 : index
    %c0_2 = arith.constant 0 : index
    %1 = vector.load %arg1[%c0_1, %c0_2] : memref<56x384xf32, #tpu.memory_space<vmem>>, vector<56x384xf32>
    %cst = arith.constant dense<0.000000e+00> : vector<32x384xf32>
    %2 = tpu.matmul %0, %1, %cst {dimension_numbers = #tpu.dot_dimension_numbers<[1], [0], [0], [1], [0, 0, 1, 1], [], []>} : vector<32x56xf32>, vector<56x384xf32>, vector<32x384xf32> -> vector<32x384xf32>
    %c0_3 = arith.constant 0 : index
    %c0_4 = arith.constant 0 : index
    %3 = vector.load %arg3[%c0_3, %c0_4] : memref<8x384xf32, #tpu.memory_space<vmem>>, vector<1x384xf32>
    %4 = vector.broadcast %3 : vector<1x384xf32> to vector<32x384xf32>
    %5 = arith.addf %2, %4 : vector<32x384xf32>
    %cst_5 = arith.constant 0.000000e+00 : f32
    %6 = vector.broadcast %cst_5 : f32 to vector<32x384xf32>
    %7 = arith.maximumf %5, %6 : vector<32x384xf32>
    %8 = arith.truncf %7 : vector<32x384xf32> to vector<32x384xbf16>
    %c0_6 = arith.constant 0 : index
    %c0_7 = arith.constant 0 : index
    %9 = vector.load %arg2[%c0_6, %c0_7] : memref<384x768xbf16, #tpu.memory_space<vmem>>, vector<384x384xbf16>
    %cst_8 = arith.constant dense<0.000000e+00> : vector<32x384xf32>
    %10 = tpu.matmul %8, %9, %cst_8 {dimension_numbers = #tpu.dot_dimension_numbers<[1], [0], [0], [1], [0, 0, 1, 1], [], []>} : vector<32x384xbf16>, vector<384x384xbf16>, vector<32x384xf32> -> vector<32x384xf32>
    %c1 = arith.constant 1 : index
    %c0_9 = arith.constant 0 : index
    %11 = vector.load %arg3[%c1, %c0_9] : memref<8x384xf32, #tpu.memory_space<vmem>>, vector<1x384xf32>
    %12 = vector.broadcast %11 : vector<1x384xf32> to vector<32x384xf32>
    %13 = arith.addf %10, %12 : vector<32x384xf32>
    %cst_10 = arith.constant 0.000000e+00 : f32
    %14 = vector.broadcast %cst_10 : f32 to vector<32x384xf32>
    %15 = arith.maximumf %13, %14 : vector<32x384xf32>
    %16 = arith.truncf %15 : vector<32x384xf32> to vector<32x384xbf16>
    %c0_11 = arith.constant 0 : index
    %c384 = arith.constant 384 : index
    %17 = vector.load %arg2[%c0_11, %c384] : memref<384x768xbf16, #tpu.memory_space<vmem>>, vector<384x256xbf16>
    %cst_12 = arith.constant dense<0.000000e+00> : vector<32x256xf32>
    %18 = tpu.matmul %16, %17, %cst_12 {dimension_numbers = #tpu.dot_dimension_numbers<[1], [0], [0], [1], [0, 0, 1, 1], [], []>} : vector<32x384xbf16>, vector<384x256xbf16>, vector<32x256xf32> -> vector<32x256xf32>
    %c2 = arith.constant 2 : index
    %c0_13 = arith.constant 0 : index
    %19 = vector.load %arg3[%c2, %c0_13] : memref<8x384xf32, #tpu.memory_space<vmem>>, vector<1x256xf32>
    %20 = vector.broadcast %19 : vector<1x256xf32> to vector<32x256xf32>
    %21 = arith.addf %18, %20 : vector<32x256xf32>
    %22 = arith.truncf %21 : vector<32x256xf32> to vector<32x256xbf16>
    %c0_14 = arith.constant 0 : index
    %c640 = arith.constant 640 : index
    %23 = vector.load %arg2[%c0_14, %c640] : memref<384x768xbf16, #tpu.memory_space<vmem>>, vector<256x128xbf16>
    %cst_15 = arith.constant dense<0.000000e+00> : vector<32x128xf32>
    %24 = tpu.matmul %22, %23, %cst_15 {dimension_numbers = #tpu.dot_dimension_numbers<[1], [0], [0], [1], [0, 0, 1, 1], [], []>} : vector<32x256xbf16>, vector<256x128xbf16>, vector<32x128xf32> -> vector<32x128xf32>
    %c3 = arith.constant 3 : index
    %c0_16 = arith.constant 0 : index
    %25 = vector.load %arg3[%c3, %c0_16] : memref<8x384xf32, #tpu.memory_space<vmem>>, vector<1x128xf32>
    %26 = vector.broadcast %25 : vector<1x128xf32> to vector<32x128xf32>
    %27 = arith.addf %24, %26 : vector<32x128xf32>
    %cst_17 = arith.constant 0.000000e+00 : f32
    %28 = vector.broadcast %cst_17 : f32 to vector<32x128xf32>
    %29 = arith.maximumf %27, %28 : vector<32x128xf32>
    %c4 = arith.constant 4 : index
    %c0_18 = arith.constant 0 : index
    %30 = vector.load %arg3[%c4, %c0_18] : memref<8x384xf32, #tpu.memory_space<vmem>>, vector<1x128xf32>
    %31 = vector.broadcast %30 : vector<1x128xf32> to vector<32x128xf32>
    %32 = arith.mulf %29, %31 : vector<32x128xf32>
    %cst_19 = arith.constant dense<0.000000e+00> : vector<32xf32>
    %33 = vector.multi_reduction <add>, %32, %cst_19 [1] : vector<32x128xf32> to vector<32xf32>
    %34 = vector.shape_cast %33 : vector<32xf32> to vector<32x1xf32>
    %c5 = arith.constant 5 : index
    %c0_20 = arith.constant 0 : index
    %35 = vector.load %arg3[%c5, %c0_20] : memref<8x384xf32, #tpu.memory_space<vmem>>, vector<1x1xf32>
    %36 = vector.broadcast %35 : vector<1x1xf32> to vector<32x1xf32>
    %37 = arith.addf %34, %36 : vector<32x1xf32>
    %c0_21 = arith.constant 0 : index
    %c0_22 = arith.constant 0 : index
    %38 = vector.load %arg4[%c0_21, %c0_22] : memref<32x1xf32, #tpu.memory_space<vmem>>, vector<32x1xf32>
    tpu.vector_store %arg4[%c0_21, %c0_22], %37 {strides = array<i32>} : memref<32x1xf32, #tpu.memory_space<vmem>>, vector<32x1xf32>,
    return
  }
}

</mosaic_0001>

<llo_original>
// kernel: convnet_forward.1
$region0: #{convnet_forward.1}
  #allocation0 [shape = 'u32[]', space=smem, size = 0x4, offset = 0x4, fixed_abs, tag = 'smem constant byte address 0x4 - core index']
  #allocation1 [shape = 'u32[144,128]{1,0:T(1,128)}', space=vmem, size = 0x12000, scoped, tag = 'internal scratch']
  %s0 = inlined_call_operand.hbm [shape: f32[32,56], index: 0, kind: input, shape index: {}]
  %s1 = inlined_call_operand.hbm [shape: f32[56,384], index: 1, kind: input, shape index: {}]
  %s2 = inlined_call_operand.hbm [shape: bf16[384,768], index: 2, kind: input, shape index: {}]
  %s3 = inlined_call_operand.hbm [shape: f32[8,384], index: 3, kind: input, shape index: {}]
  %s4 = inlined_call_operand.vmem [shape: f32[32,1], index: 4, kind: output, shape index: {}]
  %s5 = sld [smem:[#allocation0]]
  $region42: #{convnet_forward.1} parent=0
    _
  %s7 = ssub.s32 1, %s5
  %s8 = scalar_select 0, %s7, %s5
  $region1: #{convnet_forward.1} parent=0
    #allocation2 [shape = 'u8[16384]{0}', space=vmem, size = 0x4000, scoped, tag = 'input window, operand 0, single buffered']
    #allocation3 [shape = 's32[1]{0}', space=sflag, size = 0x4, scoped, tag = 'scoped memory for convnet_forward.1']
    #allocation4 [shape = 'u8[86016]{0}', space=vmem, size = 0x15000, scoped, tag = 'input window, operand 1, single buffered']
    #allocation5 [shape = 's32[1]{0}', space=sflag, size = 0x4, scoped, tag = 'scoped memory for convnet_forward.1']
    #allocation6 [shape = 'u8[589824]{0}', space=vmem, size = 0x90000, scoped, tag = 'input window, operand 2, single buffered']
    #allocation7 [shape = 'u8[12288]{0}', space=vmem, size = 0x3000, scoped, tag = 'input window, operand 3, single buffered']
    #allocation8 [shape = 's32[1]{0}', space=sflag, size = 0x4, scoped, tag = 'scoped memory for convnet_forward.1']
    %9 = vsyncpa [#allocation3], 0
    %10 = vsyncpa [#allocation5], 0
    %11 = vsyncpa [#allocation8], 0
    // Predicated region
    $region2: #{convnet_forward.1} parent=1 // pred_check
      _
    $region3: #{convnet_forward.1} parent=1 // pred_check_branch
      %13 = sbr.rel (0) target = $region5
    $region4: #{convnet_forward.1} parent=1 // pred_region
      %s15 = ssub.s32 512, 512
      %16 = vsyncadd [#allocation3], %s15
      %s17 = sshll.u32 [#allocation2], 4
      %s18 = int_to_ptr.vmem [resolvable:$true] %s17
      %23 = dma.hbm_to_vmem [thread:$0]  %s0, 512, %s18, [#allocation3], 128, 128, 8
    $region5: #{convnet_forward.1} parent=1 // pred_fallthru
      _
    // Predicated region
    $region6: #{convnet_forward.1} parent=1 // pred_check
      _
    $region7: #{convnet_forward.1} parent=1 // pred_check_branch
      %25 = sbr.rel (0) target = $region9
    $region8: #{convnet_forward.1} parent=1 // pred_region
      %s27 = ssub.s32 2688, 2688
      %28 = vsyncadd [#allocation5], %s27
      %s29 = sshll.u32 [#allocation4], 4
      %s30 = int_to_ptr.vmem [resolvable:$true] %s29
      %35 = dma.hbm_to_vmem [thread:$0]  %s1, 2688, %s30, [#allocation5], 384, 384, 24
    $region9: #{convnet_forward.1} parent=1 // pred_fallthru
      _
    // Predicated region
    $region10: #{convnet_forward.1} parent=1 // pred_check
      _
    $region11: #{convnet_forward.1} parent=1 // pred_check_branch
      %37 = sbr.rel (0) target = $region13
    $region12: #{convnet_forward.1} parent=1 // pred_region
      %s39 = ssub.s32 18432, 18432
      %40 = vsyncadd [#allocation5], %s39
      %s41 = sshll.u32 [#allocation6], 4
      %s42 = int_to_ptr.vmem [resolvable:$true] %s41
      %47 = dma.hbm_to_vmem [thread:$0]  %s2, 18432, %s42, [#allocation5], 384, 384, 24
    $region13: #{convnet_forward.1} parent=1 // pred_fallthru
      _
    // Predicated region
    $region14: #{convnet_forward.1} parent=1 // pred_check
      _
    $region15: #{convnet_forward.1} parent=1 // pred_check_branch
      %49 = sbr.rel (0) target = $region17
    $region16: #{convnet_forward.1} parent=1 // pred_region
      %s51 = ssub.s32 384, 384
      %52 = vsyncadd [#allocation8], %s51
      %s54 = sshll.u32 [#allocation7], 4
      %s55 = int_to_ptr.vmem [resolvable:$true] %s54
      %57 = dma.hbm_to_vmem [thread:$0]  %s3, 384, %s55, [#allocation8]
    $region17: #{convnet_forward.1} parent=1 // pred_fallthru
      _
    // Predicated region
    $region18: #{convnet_forward.1} parent=1 // pred_check
      _
    $region19: #{convnet_forward.1} parent=1 // pred_check_branch
      %59 = sbr.rel (0) target = $region21
    $region20: #{convnet_forward.1} parent=1 // pred_region
      %60 = dma.done [#allocation3], 512
    $region21: #{convnet_forward.1} parent=1 // pred_fallthru
      _
    // Predicated region
    $region22: #{convnet_forward.1} parent=1 // pred_check
      _
    $region23: #{convnet_forward.1} parent=1 // pred_check_branch
      %62 = sbr.rel (0) target = $region25
    $region24: #{convnet_forward.1} parent=1 // pred_region
      %63 = dma.done [#allocation5], 2688
    $region25: #{convnet_forward.1} parent=1 // pred_fallthru
      _
    // Predicated region
    $region26: #{convnet_forward.1} parent=1 // pred_check
      _
    $region27: #{convnet_forward.1} parent=1 // pred_check_branch
      %65 = sbr.rel (0) target = $region29
    $region28: #{convnet_forward.1} parent=1 // pred_region
      %66 = dma.done [#allocation5], 18432
    $region29: #{convnet_forward.1} parent=1 // pred_fallthru
      _
    // Predicated region
    $region30: #{convnet_forward.1} parent=1 // pred_check
      _
    $region31: #{convnet_forward.1} parent=1 // pred_check_branch
      %68 = sbr.rel (0) target = $region33
    $region32: #{convnet_forward.1} parent=1 // pred_region
      %69 = dma.done [#allocation8], 384
    $region33: #{convnet_forward.1} parent=1 // pred_fallthru
      _
    %v71 = vld [vmem:[#allocation2] sm:$0xff]
    %v72 = vld [vmem:[#allocation2 + $0x8] sm:$0xff]
    %v73 = vld [vmem:[#allocation2 + $0x10] sm:$0xff]
    %v74 = vld [vmem:[#allocation2 + $0x18] sm:$0xff]
    %v75 = vld [vmem:[#allocation4] sm:$0xff]
    %v76 = vld [vmem:[#allocation4 + $0x8] sm:$0xff]
    %v77 = vld [vmem:[#allocation4 + $0x10] sm:$0xff]
    %v78 = vld [vmem:[#allocation4 + $0x18] sm:$0xff]
    %v79 = vld [vmem:[#allocation4 + $0x20] sm:$0xff]
    %v80 = vld [vmem:[#allocation4 + $0x28] sm:$0xff]
    %v81 = vld [vmem:[#allocation4 + $0x30] sm:$0xff]
    %v82 = vld [vmem:[#allocation4 + $0x38] sm:$0xff]
    %v83 = vld [vmem:[#allocation4 + $0x40] sm:$0xff]
    %v84 = vld [vmem:[#allocation4 + $0x48] sm:$0xff]
    %v85 = vld [vmem:[#allocation4 + $0x50] sm:$0xff]
    %v86 = vld [vmem:[#allocation4 + $0x58] sm:$0xff]
    %v87 = vld [vmem:[#allocation4 + $0x60] sm:$0xff]
    %v88 = vld [vmem:[#allocation4 + $0x68] sm:$0xff]
    %v89 = vld [vmem:[#allocation4 + $0x70] sm:$0xff]
    %v90 = vld [vmem:[#allocation4 + $0x78] sm:$0xff]
    %v91 = vld [vmem:[#allocation4 + $0x80] sm:$0xff]
    %v92 = vld [vmem:[#allocation4 + $0x88] sm:$0xff]
    %v93 = vld [vmem:[#allocation4 + $0x90] sm:$0xff]
    %v94 = vld [vmem:[#allocation4 + $0x98] sm:$0xff]
    %v95 = vld [vmem:[#allocation4 + $0xa0] sm:$0xff]
    %v96 = vld [vmem:[#allocation7] ss:$8 sm:$0x7]
    %v98 = vlaneseq
    %v99 = vshrl.u32 %v98, 7
    %v100 = vsub.s32 0, %v99
    %v101 = vrot.slane %v96, %v100
    %v102 = vlaneseq
    %v103 = vshrl.u32 %v102, 7
    %v104 = vsub.s32 1, %v103
    %v105 = vrot.slane %v96, %v104
    %v106 = vlaneseq
    %v107 = vshrl.u32 %v106, 7
    %v108 = vsub.s32 2, %v107
    %v109 = vrot.slane %v96, %v108
    %vm113 = vcmask 457728
    %v115 = vsel %vm113, %v71, 0
    %v118 = vsel %vm113, %v72, 0
    %v121 = vsel %vm113, %v73, 0
    %v124 = vsel %vm113, %v74, 0
    %126 = vmatprep.subr.mxu0 0.0
    %127 = vmatpush1.msra.mxu0 0.0
    %128 = vmatprep.subr.mxu0 0.0
    %129 = vmatpush1.msra.mxu0 0.0
    %130 = vmatprep.subr.mxu0 0.0
    %131 = vmatpush1.msra.mxu0 0.0
    %132 = vmatprep.subr.mxu0 0.0
    %133 = vmatpush1.msra.mxu0 0.0
    %134 = vmatprep.subr.mxu0 0.0
    %135 = vmatpush1.msra.mxu0 0.0
    %136 = vmatprep.subr.mxu0 0.0
    %137 = vmatpush1.msra.mxu0 0.0
    %138 = vmatprep.subr.mxu0 0.0
    %139 = vmatpush1.msra.mxu0 0.0
    %140 = vmatprep.subr.mxu0 0.0
    %141 = vmatpush1.msra.mxu0 0.0
    %142 = vmatprep.subr.mxu0 0.0
    %143 = vmatpush1.msra.mxu0 0.0
    %144 = vmatprep.subr.mxu0 %v94
    %145 = vmatpush1.msra.mxu0 %v93
    %146 = vmatprep.subr.mxu0 %v91
    %147 = vmatpush1.msra.mxu0 %v90
    %148 = vmatprep.subr.mxu0 %v88
    %149 = vmatpush1.msra.mxu0 %v87
    %150 = vmatprep.subr.mxu0 %v85
    %151 = vmatpush1.msra.mxu0 %v84
    %152 = vmatprep.subr.mxu0 %v82
    %153 = vmatpush1.msra.mxu0 %v81
    %154 = vmatprep.subr.mxu0 %v79
    %155 = vmatpush1.msra.mxu0 %v78
    %156 = vmatprep.subr.mxu0 %v76
    %157 = vmatpush1.msra.mxu0 %v75
    %158 = vmatprep.subr.mxu0 0.0
    %159 = vmatpush2.msra.mxu0 0.0
    %160 = vmatprep.subr.mxu0 0.0
    %161 = vmatpush2.msra.mxu0 0.0
    %162 = vmatprep.subr.mxu0 0.0
    %163 = vmatpush2.msra.mxu0 0.0
    %164 = vmatprep.subr.mxu0 0.0
    %165 = vmatpush2.msra.mxu0 0.0
    %166 = vmatprep.subr.mxu0 0.0
    %167 = vmatpush2.msra.mxu0 0.0
    %168 = vmatprep.subr.mxu0 0.0
    %169 = vmatpush2.msra.mxu0 0.0
    %170 = vmatprep.subr.mxu0 0.0
    %171 = vmatpush2.msra.mxu0 0.0
    %172 = vmatprep.subr.mxu0 0.0
    %173 = vmatpush2.msra.mxu0 0.0
    %174 = vmatprep.subr.mxu0 0.0
    %175 = vmatpush2.msra.mxu0 0.0
    %176 = vmatprep.subr.mxu0 0.0
    %177 = vmatpush2.msra.mxu0 0.0
    %178 = vmatprep.subr.mxu0 0.0
    %179 = vmatpush2.msra.mxu0 0.0
    %180 = vmatprep.subr.mxu0 0.0
    %181 = vmatpush2.msra.mxu0 0.0
    %182 = vmatprep.subr.mxu0 0.0
    %183 = vmatpush2.msra.mxu0 0.0
    %184 = vmatprep.subr.mxu0 0.0
    %185 = vmatpush2.msra.mxu0 0.0
    %186 = vmatprep.subr.mxu0 0.0
    %187 = vmatpush2.msra.mxu0 0.0
    %188 = vmatprep.subr.mxu0 0.0
    %189 = vmatpush2.msra.mxu0 0.0
    %190 = vmatprep.mubr.f32.mxu0 0.0
    %191 = vmatmul.mubr.f32.gmra.mxu0 %v115
    %v192 = vpop.f32.mrf.mxu0
    %v193 = vadd.f32 %v101, %v192
    %v194 = vpop.f32.mrf.mxu0
    %v195 = vadd.f32 %v105, %v194
    %196 = vmatprep.mubr.f32.mxu0 0.0
    %197 = vmatmul.mubr.f32.gmra.mxu0 %v118
    %v198 = vpop.f32.mrf.mxu0
    %v199 = vadd.f32 %v101, %v198
    %v200 = vpop.f32.mrf.mxu0
    %v201 = vadd.f32 %v105, %v200
    %202 = vmatprep.mubr.f32.mxu0 0.0
    %203 = vmatmul.mubr.f32.gmra.mxu0 %v121
    %v204 = vpop.f32.mrf.mxu0
    %v205 = vadd.f32 %v101, %v204
    %v206 = vpop.f32.mrf.mxu0
    %v207 = vadd.f32 %v105, %v206
    %208 = vmatprep.mubr.f32.mxu0 0.0
    %209 = vmatmul.mubr.f32.gmra.mxu0 %v124
    %v210 = vpop.f32.mrf.mxu0
    %v211 = vadd.f32 %v101, %v210
    %v212 = vpop.f32.mrf.mxu0
    %v213 = vadd.f32 %v105, %v212
    %214 = vdwg.mxu0
    %215 = vmatprep.subr.mxu0 0.0
    %216 = vmatpush1.msra.mxu0 0.0
    %217 = vmatprep.subr.mxu0 0.0
    %218 = vmatpush1.msra.mxu0 0.0
    %219 = vmatprep.subr.mxu0 0.0
    %220 = vmatpush1.msra.mxu0 0.0
    %221 = vmatprep.subr.mxu0 0.0
    %222 = vmatpush1.msra.mxu0 0.0
    %223 = vmatprep.subr.mxu0 0.0
    %224 = vmatpush1.msra.mxu0 0.0
    %225 = vmatprep.subr.mxu0 0.0
    %226 = vmatpush1.msra.mxu0 0.0
    %227 = vmatprep.subr.mxu0 0.0
    %228 = vmatpush1.msra.mxu0 0.0
    %229 = vmatprep.subr.mxu0 0.0
    %230 = vmatpush1.msra.mxu0 0.0
    %231 = vmatprep.subr.mxu0 0.0
    %232 = vmatpush1.msra.mxu0 0.0
    %233 = vmatprep.subr.mxu0 0.0
    %234 = vmatpush1.msra.mxu0 %v95
    %235 = vmatprep.subr.mxu0 0.0
    %236 = vmatpush1.msra.mxu0 %v92
    %237 = vmatprep.subr.mxu0 0.0
    %238 = vmatpush1.msra.mxu0 %v89
    %239 = vmatprep.subr.mxu0 0.0
    %240 = vmatpush1.msra.mxu0 %v86
    %241 = vmatprep.subr.mxu0 0.0
    %242 = vmatpush1.msra.mxu0 %v83
    %243 = vmatprep.subr.mxu0 0.0
    %244 = vmatpush1.msra.mxu0 %v80
    %245 = vmatprep.subr.mxu0 0.0
    %246 = vmatpush1.msra.mxu0 %v77
    %247 = vmatprep.subr.mxu0 0.0
    %248 = vmatpush2.msra.mxu0 0.0
    %249 = vmatprep.subr.mxu0 0.0
    %250 = vmatpush2.msra.mxu0 0.0
    %251 = vmatprep.subr.mxu0 0.0
    %252 = vmatpush2.msra.mxu0 0.0
    %253 = vmatprep.subr.mxu0 0.0
    %254 = vmatpush2.msra.mxu0 0.0
    %255 = vmatprep.subr.mxu0 0.0
    %256 = vmatpush2.msra.mxu0 0.0
    %257 = vmatprep.subr.mxu0 0.0
    %258 = vmatpush2.msra.mxu0 0.0
    %259 = vmatprep.subr.mxu0 0.0
    %260 = vmatpush2.msra.mxu0 0.0
    %261 = vmatprep.subr.mxu0 0.0
    %262 = vmatpush2.msra.mxu0 0.0
    %263 = vmatprep.subr.mxu0 0.0
    %264 = vmatpush2.msra.mxu0 0.0
    %265 = vmatprep.subr.mxu0 0.0
    %266 = vmatpush2.msra.mxu0 0.0
    %267 = vmatprep.subr.mxu0 0.0
    %268 = vmatpush2.msra.mxu0 0.0
    %269 = vmatprep.subr.mxu0 0.0
    %270 = vmatpush2.msra.mxu0 0.0
    %271 = vmatprep.subr.mxu0 0.0
    %272 = vmatpush2.msra.mxu0 0.0
    %273 = vmatprep.subr.mxu0 0.0
    %274 = vmatpush2.msra.mxu0 0.0
    %275 = vmatprep.subr.mxu0 0.0
    %276 = vmatpush2.msra.mxu0 0.0
    %277 = vmatprep.subr.mxu0 0.0
    %278 = vmatpush2.msra.mxu0 0.0
    %279 = vmatprep.mubr.f32.mxu0 0.0
    %280 = vmatmul.mubr.f32.gmra.mxu0 %v115
    %v281 = vpop.f32.mrf.mxu0
    %v282 = vadd.f32 %v109, %v281
    %v283 = vpop.f32.mrf.mxu0
    %284 = vmatprep.mubr.f32.mxu0 0.0
    %285 = vmatmul.mubr.f32.gmra.mxu0 %v118
    %v286 = vpop.f32.mrf.mxu0
    %v287 = vadd.f32 %v109, %v286
    %v288 = vpop.f32.mrf.mxu0
    %289 = vmatprep.mubr.f32.mxu0 0.0
    %290 = vmatmul.mubr.f32.gmra.mxu0 %v121
    %v291 = vpop.f32.mrf.mxu0
    %v292 = vadd.f32 %v109, %v291
    %v293 = vpop.f32.mrf.mxu0
    %294 = vmatprep.mubr.f32.mxu0 0.0
    %295 = vmatmul.mubr.f32.gmra.mxu0 %v124
    %v296 = vpop.f32.mrf.mxu0
    %v297 = vadd.f32 %v109, %v296
    %v298 = vpop.f32.mrf.mxu0
    %299 = vdwg.mxu0
    %v300 = vmax.f32 %v193, 0.0
    %v301 = vmax.f32 %v195, 0.0
    %v302 = vmax.f32 %v282, 0.0
    %v303 = vmax.f32 %v199, 0.0
    %v304 = vmax.f32 %v201, 0.0
    %v305 = vmax.f32 %v287, 0.0
    %v306 = vmax.f32 %v205, 0.0
    %v307 = vmax.f32 %v207, 0.0
    %v308 = vmax.f32 %v292, 0.0
    %v309 = vmax.f32 %v211, 0.0
    %v310 = vmax.f32 %v213, 0.0
    %v311 = vmax.f32 %v297, 0.0
    %v312 = vpack.c.bf16 %v303, %v300
    %v313 = vpack.c.bf16 %v304, %v301
    %v314 = vpack.c.bf16 %v305, %v302
    %v315 = vpack.c.bf16 %v309, %v306
    %v316 = vpack.c.bf16 %v310, %v307
    %v317 = vpack.c.bf16 %v311, %v308
    %v318 = vld [vmem:[#allocation6] sm:$0xff]
    %v319 = vld [vmem:[#allocation6 + $0x8] sm:$0xf]
    %v320 = vld [vmem:[#allocation6 + $0x18] sm:$0xff]
    %v321 = vld [vmem:[#allocation6 + $0x20] sm:$0xf]
    %v322 = vld [vmem:[#allocation6 + $0x30] sm:$0xff]
    %v323 = vld [vmem:[#allocation6 + $0x38] sm:$0xf]
    %v324 = vld [vmem:[#allocation6 + $0x48] sm:$0xff]
    %v325 = vld [vmem:[#allocation6 + $0x50] sm:$0xf]
    %v326 = vld [vmem:[#allocation6 + $0x60] sm:$0xff]
    %v327 = vld [vmem:[#allocation6 + $0x68] sm:$0xf]
    %v328 = vld [vmem:[#allocation6 + $0x78] sm:$0xff]
    %v329 = vld [vmem:[#allocation6 + $0x80] sm:$0xf]
    %v330 = vld [vmem:[#allocation6 + $0x90] sm:$0xff]
    %v331 = vld [vmem:[#allocation6 + $0x98] sm:$0xf]
    %v332 = vld [vmem:[#allocation6 + $0xa8] sm:$0xff]
    %v333 = vld [vmem:[#allocation6 + $0xb0] sm:$0xf]
    %v334 = vld [vmem:[#allocation6 + $0xc0] sm:$0xff]
    %v335 = vld [vmem:[#allocation6 + $0xc8] sm:$0xf]
    %v336 = vld [vmem:[#allocation6 + $0xd8] sm:$0xff]
    %v337 = vld [vmem:[#allocation6 + $0xe0] sm:$0xf]
    %v338 = vld [vmem:[#allocation6 + $0xf0] sm:$0xff]
    %v339 = vld [vmem:[#allocation6 + $0xf8] sm:$0xf]
    %v340 = vld [vmem:[#allocation6 + $0x108] sm:$0xff]
    %v341 = vld [vmem:[#allocation6 + $0x110] sm:$0xf]
    %v342 = vld [vmem:[#allocation6 + $0x120] sm:$0xff]
    %v343 = vld [vmem:[#allocation6 + $0x128] sm:$0xf]
    %v344 = vld [vmem:[#allocation6 + $0x138] sm:$0xff]
    %v345 = vld [vmem:[#allocation6 + $0x140] sm:$0xf]
    %v346 = vld [vmem:[#allocation6 + $0x150] sm:$0xff]
    %v347 = vld [vmem:[#allocation6 + $0x158] sm:$0xf]
    %v348 = vld [vmem:[#allocation6 + $0x168] sm:$0xff]
    %v349 = vld [vmem:[#allocation6 + $0x170] sm:$0xf]
    %v350 = vld [vmem:[#allocation6 + $0x180] sm:$0xff]
    %v351 = vld [vmem:[#allocation6 + $0x188] sm:$0xf]
    %v352 = vld [vmem:[#allocation6 + $0x198] sm:$0xff]
    %v353 = vld [vmem:[#allocation6 + $0x1a0] sm:$0xf]
    %v354 = vld [vmem:[#allocation6 + $0x1b0] sm:$0xff]
    %v355 = vld [vmem:[#allocation6 + $0x1b8] sm:$0xf]
    %v356 = vld [vmem:[#allocation6 + $0x1c8] sm:$0xff]
    %v357 = vld [vmem:[#allocation6 + $0x1d0] sm:$0xf]
    %v358 = vld [vmem:[#allocation6 + $0x1e0] sm:$0xff]
    %v359 = vld [vmem:[#allocation6 + $0x1e8] sm:$0xf]
    %v360 = vld [vmem:[#allocation6 + $0x1f8] sm:$0xff]
    %v361 = vld [vmem:[#allocation6 + $0x200] sm:$0xf]
    %v362 = vld [vmem:[#allocation6 + $0x210] sm:$0xff]
    %v363 = vld [vmem:[#allocation6 + $0x218] sm:$0xf]
    %v364 = vld [vmem:[#allocation6 + $0x228] sm:$0xff]
    %v365 = vld [vmem:[#allocation6 + $0x230] sm:$0xf]
    %v366 = vld [vmem:[#allocation6 + $0x240] sm:$0xff]
    %v367 = vld [vmem:[#allocation6 + $0x248] sm:$0xf]
    %v368 = vld [vmem:[#allocation6 + $0x258] sm:$0xff]
    %v369 = vld [vmem:[#allocation6 + $0x260] sm:$0xf]
    %v370 = vld [vmem:[#allocation6 + $0x270] sm:$0xff]
    %v371 = vld [vmem:[#allocation6 + $0x278] sm:$0xf]
    %v372 = vld [vmem:[#allocation6 + $0x288] sm:$0xff]
    %v373 = vld [vmem:[#allocation6 + $0x290] sm:$0xf]
    %v374 = vld [vmem:[#allocation6 + $0x2a0] sm:$0xff]
    %v375 = vld [vmem:[#allocation6 + $0x2a8] sm:$0xf]
    %v376 = vld [vmem:[#allocation6 + $0x2b8] sm:$0xff]
    %v377 = vld [vmem:[#allocation6 + $0x2c0] sm:$0xf]
    %v378 = vld [vmem:[#allocation6 + $0x2d0] sm:$0xff]
    %v379 = vld [vmem:[#allocation6 + $0x2d8] sm:$0xf]
    %v380 = vld [vmem:[#allocation6 + $0x2e8] sm:$0xff]
    %v381 = vld [vmem:[#allocation6 + $0x2f0] sm:$0xf]
    %v382 = vld [vmem:[#allocation6 + $0x300] sm:$0xff]
    %v383 = vld [vmem:[#allocation6 + $0x308] sm:$0xf]
    %v384 = vld [vmem:[#allocation6 + $0x318] sm:$0xff]
    %v385 = vld [vmem:[#allocation6 + $0x320] sm:$0xf]
    %v386 = vld [vmem:[#allocation6 + $0x330] sm:$0xff]
    %v387 = vld [vmem:[#allocation6 + $0x338] sm:$0xf]
    %v388 = vld [vmem:[#allocation6 + $0x348] sm:$0xff]
    %v389 = vld [vmem:[#allocation6 + $0x350] sm:$0xf]
    %v390 = vld [vmem:[#allocation6 + $0x360] sm:$0xff]
    %v391 = vld [vmem:[#allocation6 + $0x368] sm:$0xf]
    %v392 = vld [vmem:[#allocation6 + $0x378] sm:$0xff]
    %v393 = vld [vmem:[#allocation6 + $0x380] sm:$0xf]
    %v394 = vld [vmem:[#allocation6 + $0x390] sm:$0xff]
    %v395 = vld [vmem:[#allocation6 + $0x398] sm:$0xf]
    %v396 = vld [vmem:[#allocation6 + $0x3a8] sm:$0xff]
    %v397 = vld [vmem:[#allocation6 + $0x3b0] sm:$0xf]
    %v398 = vld [vmem:[#allocation6 + $0x3c0] sm:$0xff]
    %v399 = vld [vmem:[#allocation6 + $0x3c8] sm:$0xf]
    %v400 = vld [vmem:[#allocation6 + $0x3d8] sm:$0xff]
    %v401 = vld [vmem:[#allocation6 + $0x3e0] sm:$0xf]
    %v402 = vld [vmem:[#allocation6 + $0x3f0] sm:$0xff]
    %v403 = vld [vmem:[#allocation6 + $0x3f8] sm:$0xf]
    %v404 = vld [vmem:[#allocation6 + $0x408] sm:$0xff]
    %v405 = vld [vmem:[#allocation6 + $0x410] sm:$0xf]
    %v406 = vld [vmem:[#allocation6 + $0x420] sm:$0xff]
    %v407 = vld [vmem:[#allocation6 + $0x428] sm:$0xf]
    %v408 = vld [vmem:[#allocation6 + $0x438] sm:$0xff]
    %v409 = vld [vmem:[#allocation6 + $0x440] sm:$0xf]
    %v410 = vld [vmem:[#allocation6 + $0x450] sm:$0xff]
    %v411 = vld [vmem:[#allocation6 + $0x458] sm:$0xf]
    %v412 = vld [vmem:[#allocation6 + $0x468] sm:$0xff]
    %v413 = vld [vmem:[#allocation6 + $0x470] sm:$0xf]
    %s414 = scalar_lea.vmem [#allocation7], 1
    %v415 = vld [vmem:[%s414] ss:$8 sm:$0x7]
    %v417 = vlaneseq
    %v418 = vshrl.u32 %v417, 7
    %v419 = vsub.s32 0, %v418
    %v420 = vrot.slane %v415, %v419
    %v421 = vlaneseq
    %v422 = vshrl.u32 %v421, 7
    %v423 = vsub.s32 1, %v422
    %v424 = vrot.slane %v415, %v423
    %v425 = vlaneseq
    %v426 = vshrl.u32 %v425, 7
    %v427 = vsub.s32 2, %v426
    %v428 = vrot.slane %v415, %v427
    %v528 = vunpack.c.l.b16 %v318
    %v529 = vunpack.c.h.b16 %v318
    %v530 = vunpack.c.l.b16 %v319
    %v531 = vunpack.c.l.b16 %v320
    %v532 = vunpack.c.h.b16 %v320
    %v533 = vunpack.c.l.b16 %v321
    %v534 = vunpack.c.l.b16 %v322
    %v535 = vunpack.c.h.b16 %v322
    %v536 = vunpack.c.l.b16 %v323
    %v537 = vunpack.c.l.b16 %v324
    %v538 = vunpack.c.h.b16 %v324
    %v539 = vunpack.c.l.b16 %v325
    %v540 = vunpack.c.l.b16 %v326
    %v541 = vunpack.c.h.b16 %v326
    %v542 = vunpack.c.l.b16 %v327
    %v543 = vunpack.c.l.b16 %v328
    %v544 = vunpack.c.h.b16 %v328
    %v545 = vunpack.c.l.b16 %v329
    %v546 = vunpack.c.l.b16 %v330
    %v547 = vunpack.c.h.b16 %v330
    %v548 = vunpack.c.l.b16 %v331
    %v549 = vunpack.c.l.b16 %v332
    %v550 = vunpack.c.h.b16 %v332
    %v551 = vunpack.c.l.b16 %v333
    %v552 = vunpack.c.l.b16 %v334
    %v553 = vunpack.c.h.b16 %v334
    %v554 = vunpack.c.l.b16 %v335
    %v555 = vunpack.c.l.b16 %v336
    %v556 = vunpack.c.h.b16 %v336
    %v557 = vunpack.c.l.b16 %v337
    %v558 = vunpack.c.l.b16 %v338
    %v559 = vunpack.c.h.b16 %v338
    %v560 = vunpack.c.l.b16 %v339
    %v561 = vunpack.c.l.b16 %v340
    %v562 = vunpack.c.h.b16 %v340
    %v563 = vunpack.c.l.b16 %v341
    %v564 = vunpack.c.l.b16 %v342
    %v565 = vunpack.c.h.b16 %v342
    %v566 = vunpack.c.l.b16 %v343
    %v567 = vunpack.c.l.b16 %v344
    %v568 = vunpack.c.h.b16 %v344
    %v569 = vunpack.c.l.b16 %v345
    %v570 = vunpack.c.l.b16 %v346
    %v571 = vunpack.c.h.b16 %v346
    %v572 = vunpack.c.l.b16 %v347
    %v573 = vunpack.c.l.b16 %v348
    %v574 = vunpack.c.h.b16 %v348
    %v575 = vunpack.c.l.b16 %v349
    %v576 = vunpack.c.l.b16 %v350
    %v577 = vunpack.c.h.b16 %v350
    %v578 = vunpack.c.l.b16 %v351
    %v579 = vunpack.c.l.b16 %v352
    %v580 = vunpack.c.h.b16 %v352
    %v581 = vunpack.c.l.b16 %v353
    %v582 = vunpack.c.l.b16 %v354
    %v583 = vunpack.c.h.b16 %v354
    %v584 = vunpack.c.l.b16 %v355
    %v585 = vunpack.c.l.b16 %v356
    %v586 = vunpack.c.h.b16 %v356
    %v587 = vunpack.c.l.b16 %v357
    %v588 = vunpack.c.l.b16 %v358
    %v589 = vunpack.c.h.b16 %v358
    %v590 = vunpack.c.l.b16 %v359
    %v591 = vunpack.c.l.b16 %v360
    %v592 = vunpack.c.h.b16 %v360
    %v593 = vunpack.c.l.b16 %v361
    %v594 = vunpack.c.l.b16 %v362
    %v595 = vunpack.c.h.b16 %v362
    %v596 = vunpack.c.l.b16 %v363
    %v597 = vunpack.c.l.b16 %v364
    %v598 = vunpack.c.h.b16 %v364
    %v599 = vunpack.c.l.b16 %v365
    %v600 = vunpack.c.l.b16 %v366
    %v601 = vunpack.c.h.b16 %v366
    %v602 = vunpack.c.l.b16 %v367
    %v603 = vunpack.c.l.b16 %v368
    %v604 = vunpack.c.h.b16 %v368
    %v605 = vunpack.c.l.b16 %v369
    %v606 = vunpack.c.l.b16 %v370
    %v607 = vunpack.c.h.b16 %v370
    %v608 = vunpack.c.l.b16 %v371
    %v609 = vunpack.c.l.b16 %v372
    %v610 = vunpack.c.h.b16 %v372
    %v611 = vunpack.c.l.b16 %v373
    %v612 = vunpack.c.l.b16 %v374
    %v613 = vunpack.c.h.b16 %v374
    %v614 = vunpack.c.l.b16 %v375
    %v615 = vunpack.c.l.b16 %v376
    %v616 = vunpack.c.h.b16 %v376
    %v617 = vunpack.c.l.b16 %v377
    %v618 = vunpack.c.l.b16 %v378
    %v619 = vunpack.c.h.b16 %v378
    %v620 = vunpack.c.l.b16 %v379
    %v621 = vunpack.c.l.b16 %v380
    %v622 = vunpack.c.h.b16 %v380
    %v623 = vunpack.c.l.b16 %v381
    %v624 = vunpack.c.l.b16 %v382
    %v625 = vunpack.c.h.b16 %v382
    %v626 = vunpack.c.l.b16 %v383
    %v627 = vunpack.c.l.b16 %v384
    %v628 = vunpack.c.h.b16 %v384
    %v629 = vunpack.c.l.b16 %v385
    %v630 = vunpack.c.l.b16 %v386
    %v631 = vunpack.c.h.b16 %v386
    %v632 = vunpack.c.l.b16 %v387
    %v633 = vunpack.c.l.b16 %v388
    %v634 = vunpack.c.h.b16 %v388
    %v635 = vunpack.c.l.b16 %v389
    %v636 = vunpack.c.l.b16 %v390
    %v637 = vunpack.c.h.b16 %v390
    %v638 = vunpack.c.l.b16 %v391
    %v639 = vunpack.c.l.b16 %v392
    %v640 = vunpack.c.h.b16 %v392
    %v641 = vunpack.c.l.b16 %v393
    %v642 = vunpack.c.l.b16 %v394
    %v643 = vunpack.c.h.b16 %v394
    %v644 = vunpack.c.l.b16 %v395
    %v645 = vunpack.c.l.b16 %v396
    %v646 = vunpack.c.h.b16 %v396
    %v647 = vunpack.c.l.b16 %v397
    %v648 = vunpack.c.l.b16 %v398
    %v649 = vunpack.c.h.b16 %v398
    %v650 = vunpack.c.l.b16 %v399
    %v651 = vunpack.c.l.b16 %v400
    %v652 = vunpack.c.h.b16 %v400
    %v653 = vunpack.c.l.b16 %v401
    %v654 = vunpack.c.l.b16 %v402
    %v655 = vunpack.c.h.b16 %v402
    %v656 = vunpack.c.l.b16 %v403
    %v657 = vunpack.c.l.b16 %v404
    %v658 = vunpack.c.h.b16 %v404
    %v659 = vunpack.c.l.b16 %v405
    %v660 = vunpack.c.l.b16 %v406
    %v661 = vunpack.c.h.b16 %v406
    %v662 = vunpack.c.l.b16 %v407
    %v663 = vunpack.c.l.b16 %v408
    %v664 = vunpack.c.h.b16 %v408
    %v665 = vunpack.c.l.b16 %v409
    %v666 = vunpack.c.l.b16 %v410
    %v667 = vunpack.c.h.b16 %v410
    %v668 = vunpack.c.l.b16 %v411
    %v669 = vunpack.c.l.b16 %v412
    %v670 = vunpack.c.h.b16 %v412
    %v671 = vunpack.c.l.b16 %v413
    %v672 = vpack.c.b16 %v531, %v528
    %v673 = vpack.c.b16 %v532, %v529
    %v674 = vpack.c.b16 %v533, %v530
    %v675 = vpack.c.b16 %v537, %v534
    %v676 = vpack.c.b16 %v538, %v535
    %v677 = vpack.c.b16 %v539, %v536
    %v678 = vpack.c.b16 %v543, %v540
    %v679 = vpack.c.b16 %v544, %v541
    %v680 = vpack.c.b16 %v545, %v542
    %v681 = vpack.c.b16 %v549, %v546
    %v682 = vpack.c.b16 %v550, %v547
    %v683 = vpack.c.b16 %v551, %v548
    %v684 = vpack.c.b16 %v555, %v552
    %v685 = vpack.c.b16 %v556, %v553
    %v686 = vpack.c.b16 %v557, %v554
    %v687 = vpack.c.b16 %v561, %v558
    %v688 = vpack.c.b16 %v562, %v559
    %v689 = vpack.c.b16 %v563, %v560
    %v690 = vpack.c.b16 %v567, %v564
    %v691 = vpack.c.b16 %v568, %v565
    %v692 = vpack.c.b16 %v569, %v566
    %v693 = vpack.c.b16 %v573, %v570
    %v694 = vpack.c.b16 %v574, %v571
    %v695 = vpack.c.b16 %v575, %v572
    %v696 = vpack.c.b16 %v579, %v576
    %v697 = vpack.c.b16 %v580, %v577
    %v698 = vpack.c.b16 %v581, %v578
    %v699 = vpack.c.b16 %v585, %v582
    %v700 = vpack.c.b16 %v586, %v583
    %v701 = vpack.c.b16 %v587, %v584
    %v702 = vpack.c.b16 %v591, %v588
    %v703 = vpack.c.b16 %v592, %v589
    %v704 = vpack.c.b16 %v593, %v590
    %v705 = vpack.c.b16 %v597, %v594
    %v706 = vpack.c.b16 %v598, %v595
    %v707 = vpack.c.b16 %v599, %v596
    %v708 = vpack.c.b16 %v603, %v600
    %v709 = vpack.c.b16 %v604, %v601
    %v710 = vpack.c.b16 %v605, %v602
    %v711 = vpack.c.b16 %v609, %v606
    %v712 = vpack.c.b16 %v610, %v607
    %v713 = vpack.c.b16 %v611, %v608
    %v714 = vpack.c.b16 %v615, %v612
    %v715 = vpack.c.b16 %v616, %v613
    %v716 = vpack.c.b16 %v617, %v614
    %v717 = vpack.c.b16 %v621, %v618
    %v718 = vpack.c.b16 %v622, %v619
    %v719 = vpack.c.b16 %v623, %v620
    %v720 = vpack.c.b16 %v627, %v624
    %v721 = vpack.c.b16 %v628, %v625
    %v722 = vpack.c.b16 %v629, %v626
    %v723 = vpack.c.b16 %v633, %v630
    %v724 = vpack.c.b16 %v634, %v631
    %v725 = vpack.c.b16 %v635, %v632
    %v726 = vpack.c.b16 %v639, %v636
    %v727 = vpack.c.b16 %v640, %v637
    %v728 = vpack.c.b16 %v641, %v638
    %v729 = vpack.c.b16 %v645, %v642
    %v730 = vpack.c.b16 %v646, %v643
    %v731 = vpack.c.b16 %v647, %v644
    %v732 = vpack.c.b16 %v651, %v648
    %v733 = vpack.c.b16 %v652, %v649
    %v734 = vpack.c.b16 %v653, %v650
    %v735 = vpack.c.b16 %v657, %v654
    %v736 = vpack.c.b16 %v658, %v655
    %v737 = vpack.c.b16 %v659, %v656
    %v738 = vpack.c.b16 %v663, %v660
    %v739 = vpack.c.b16 %v664, %v661
    %v740 = vpack.c.b16 %v665, %v662
    %v741 = vpack.c.b16 %v669, %v666
    %v742 = vpack.c.b16 %v670, %v667
    %v743 = vpack.c.b16 %v671, %v668
    %816 = vmatprep.subr.bf16.mxu0 %v694
    %817 = vmatpush1.bf16.msra.mxu0 %v693
    %818 = vmatprep.subr.bf16.mxu0 %v691
    %819 = vmatpush1.bf16.msra.mxu0 %v690
    %820 = vmatprep.subr.bf16.mxu0 %v688
    %821 = vmatpush1.bf16.msra.mxu0 %v687
    %822 = vmatprep.subr.bf16.mxu0 %v685
    %823 = vmatpush1.bf16.msra.mxu0 %v684
    %824 = vmatprep.subr.bf16.mxu0 %v682
    %825 = vmatpush1.bf16.msra.mxu0 %v681
    %826 = vmatprep.subr.bf16.mxu0 %v679
    %827 = vmatpush1.bf16.msra.mxu0 %v678
    %828 = vmatprep.subr.bf16.mxu0 %v676
    %829 = vmatpush1.bf16.msra.mxu0 %v675
    %830 = vmatprep.subr.bf16.mxu0 %v673
    %831 = vmatpush1.bf16.msra.mxu0 %v672
    %832 = vmatprep.subr.bf16.mxu0 %v718
    %833 = vmatpush2.bf16.msra.mxu0 %v717
    %834 = vmatprep.subr.bf16.mxu0 %v715
    %835 = vmatpush2.bf16.msra.mxu0 %v714
    %836 = vmatprep.subr.bf16.mxu0 %v712
    %837 = vmatpush2.bf16.msra.mxu0 %v711
    %838 = vmatprep.subr.bf16.mxu0 %v709
    %839 = vmatpush2.bf16.msra.mxu0 %v708
    %840 = vmatprep.subr.bf16.mxu0 %v706
    %841 = vmatpush2.bf16.msra.mxu0 %v705
    %842 = vmatprep.subr.bf16.mxu0 %v703
    %843 = vmatpush2.bf16.msra.mxu0 %v702
    %844 = vmatprep.subr.bf16.mxu0 %v700
    %845 = vmatpush2.bf16.msra.mxu0 %v699
    %846 = vmatprep.subr.bf16.mxu0 %v697
    %847 = vmatpush2.bf16.msra.mxu0 %v696
    %848 = vmatprep.mubr.bf16.mxu0 %v313
    %849 = vmatmul.mubr.bf16.gmra.mxu0 %v312
    %v850 = vpop.f32.mrf.mxu0
    %v851 = vadd.f32 %v420, %v850
    %v852 = vpop.f32.mrf.mxu0
    %v853 = vadd.f32 %v424, %v852
    %v854 = vpop.f32.mrf.mxu0
    %v855 = vadd.f32 %v420, %v854
    %v856 = vpop.f32.mrf.mxu0
    %v857 = vadd.f32 %v424, %v856
    %858 = vmatprep.mubr.bf16.mxu0 %v316
    %859 = vmatmul.mubr.bf16.gmra.mxu0 %v315
    %v860 = vpop.f32.mrf.mxu0
    %v861 = vadd.f32 %v420, %v860
    %v862 = vpop.f32.mrf.mxu0
    %v863 = vadd.f32 %v424, %v862
    %v864 = vpop.f32.mrf.mxu0
    %v865 = vadd.f32 %v420, %v864
    %v866 = vpop.f32.mrf.mxu0
    %v867 = vadd.f32 %v424, %v866
    %868 = vdwg.mxu0
    %869 = vmatprep.subr.bf16.mxu0 %v742
    %870 = vmatpush1.bf16.msra.mxu0 %v741
    %871 = vmatprep.subr.bf16.mxu0 %v739
    %872 = vmatpush1.bf16.msra.mxu0 %v738
    %873 = vmatprep.subr.bf16.mxu0 %v736
    %874 = vmatpush1.bf16.msra.mxu0 %v735
    %875 = vmatprep.subr.bf16.mxu0 %v733
    %876 = vmatpush1.bf16.msra.mxu0 %v732
    %877 = vmatprep.subr.bf16.mxu0 %v730
    %878 = vmatpush1.bf16.msra.mxu0 %v729
    %879 = vmatprep.subr.bf16.mxu0 %v727
    %880 = vmatpush1.bf16.msra.mxu0 %v726
    %881 = vmatprep.subr.bf16.mxu0 %v724
    %882 = vmatpush1.bf16.msra.mxu0 %v723
    %883 = vmatprep.subr.bf16.mxu0 %v721
    %884 = vmatpush1.bf16.msra.mxu0 %v720
    %885 = vmatprep.subr.bf16.mxu0 0
    %886 = vmatpush2.bf16.msra.mxu0 0
    %887 = vmatprep.subr.bf16.mxu0 0
    %888 = vmatpush2.bf16.msra.mxu0 0
    %889 = vmatprep.subr.bf16.mxu0 0
    %890 = vmatpush2.bf16.msra.mxu0 0
    %891 = vmatprep.subr.bf16.mxu0 0
    %892 = vmatpush2.bf16.msra.mxu0 0
    %893 = vmatprep.subr.bf16.mxu0 0
    %894 = vmatpush2.bf16.msra.mxu0 0
    %895 = vmatprep.subr.bf16.mxu0 0
    %896 = vmatpush2.bf16.msra.mxu0 0
    %897 = vmatprep.subr.bf16.mxu0 0
    %898 = vmatpush2.bf16.msra.mxu0 0
    %899 = vmatprep.subr.bf16.mxu0 0
    %900 = vmatpush2.bf16.msra.mxu0 0
    %901 = vmatprep.mubr.bf16.mxu0 0
    %902 = vmatmul.mubr.bf16.gmra.mxu0 %v314
    %v903 = vpop.f32.mrf.mxu0
    %v904 = vadd.f32 %v851, %v903
    %v905 = vpop.f32.mrf.mxu0
    %v906 = vadd.f32 %v853, %v905
    %v907 = vpop.f32.mrf.mxu0
    %v908 = vadd.f32 %v855, %v907
    %v909 = vpop.f32.mrf.mxu0
    %v910 = vadd.f32 %v857, %v909
    %911 = vmatprep.mubr.bf16.mxu0 0
    %912 = vmatmul.mubr.bf16.gmra.mxu0 %v317
    %v913 = vpop.f32.mrf.mxu0
    %v914 = vadd.f32 %v861, %v913
    %v915 = vpop.f32.mrf.mxu0
    %v916 = vadd.f32 %v863, %v915
    %v917 = vpop.f32.mrf.mxu0
    %v918 = vadd.f32 %v865, %v917
    %v919 = vpop.f32.mrf.mxu0
    %v920 = vadd.f32 %v867, %v919
    %921 = vdwg.mxu0
    %922 = vmatprep.subr.bf16.mxu0 0
    %923 = vmatpush1.bf16.msra.mxu0 %v695
    %924 = vmatprep.subr.bf16.mxu0 0
    %925 = vmatpush1.bf16.msra.mxu0 %v692
    %926 = vmatprep.subr.bf16.mxu0 0
    %927 = vmatpush1.bf16.msra.mxu0 %v689
    %928 = vmatprep.subr.bf16.mxu0 0
    %929 = vmatpush1.bf16.msra.mxu0 %v686
    %930 = vmatprep.subr.bf16.mxu0 0
    %931 = vmatpush1.bf16.msra.mxu0 %v683
    %932 = vmatprep.subr.bf16.mxu0 0
    %933 = vmatpush1.bf16.msra.mxu0 %v680
    %934 = vmatprep.subr.bf16.mxu0 0
    %935 = vmatpush1.bf16.msra.mxu0 %v677
    %936 = vmatprep.subr.bf16.mxu0 0
    %937 = vmatpush1.bf16.msra.mxu0 %v674
    %938 = vmatprep.subr.bf16.mxu0 0
    %939 = vmatpush2.bf16.msra.mxu0 %v719
    %940 = vmatprep.subr.bf16.mxu0 0
    %941 = vmatpush2.bf16.msra.mxu0 %v716
    %942 = vmatprep.subr.bf16.mxu0 0
    %943 = vmatpush2.bf16.msra.mxu0 %v713
    %944 = vmatprep.subr.bf16.mxu0 0
    %945 = vmatpush2.bf16.msra.mxu0 %v710
    %946 = vmatprep.subr.bf16.mxu0 0
    %947 = vmatpush2.bf16.msra.mxu0 %v707
    %948 = vmatprep.subr.bf16.mxu0 0
    %949 = vmatpush2.bf16.msra.mxu0 %v704
    %950 = vmatprep.subr.bf16.mxu0 0
    %951 = vmatpush2.bf16.msra.mxu0 %v701
    %952 = vmatprep.subr.bf16.mxu0 0
    %953 = vmatpush2.bf16.msra.mxu0 %v698
    %954 = vmatprep.mubr.bf16.mxu0 %v313
    %955 = vmatmul.mubr.bf16.gmra.mxu0 %v312
    %v956 = vpop.f32.mrf.mxu0
    %v957 = vadd.f32 %v428, %v956
    %v958 = vpop.f32.mrf.mxu0
    %v959 = vpop.f32.mrf.mxu0
    %v960 = vadd.f32 %v428, %v959
    %v961 = vpop.f32.mrf.mxu0
    %962 = vmatprep.mubr.bf16.mxu0 %v316
    %963 = vmatmul.mubr.bf16.gmra.mxu0 %v315
    %v964 = vpop.f32.mrf.mxu0
    %v965 = vadd.f32 %v428, %v964
    %v966 = vpop.f32.mrf.mxu0
    %v967 = vpop.f32.mrf.mxu0
    %v968 = vadd.f32 %v428, %v967
    %v969 = vpop.f32.mrf.mxu0
    %970 = vdwg.mxu0
    %971 = vmatprep.subr.bf16.mxu0 0
    %972 = vmatpush1.bf16.msra.mxu0 %v743
    %973 = vmatprep.subr.bf16.mxu0 0
    %974 = vmatpush1.bf16.msra.mxu0 %v740
    %975 = vmatprep.subr.bf16.mxu0 0
    %976 = vmatpush1.bf16.msra.mxu0 %v737
    %977 = vmatprep.subr.bf16.mxu0 0
    %978 = vmatpush1.bf16.msra.mxu0 %v734
    %979 = vmatprep.subr.bf16.mxu0 0
    %980 = vmatpush1.bf16.msra.mxu0 %v731
    %981 = vmatprep.subr.bf16.mxu0 0
    %982 = vmatpush1.bf16.msra.mxu0 %v728
    %983 = vmatprep.subr.bf16.mxu0 0
    %984 = vmatpush1.bf16.msra.mxu0 %v725
    %985 = vmatprep.subr.bf16.mxu0 0
    %986 = vmatpush1.bf16.msra.mxu0 %v722
    %987 = vmatprep.subr.bf16.mxu0 0
    %988 = vmatpush2.bf16.msra.mxu0 0
    %989 = vmatprep.subr.bf16.mxu0 0
    %990 = vmatpush2.bf16.msra.mxu0 0
    %991 = vmatprep.subr.bf16.mxu0 0
    %992 = vmatpush2.bf16.msra.mxu0 0
    %993 = vmatprep.subr.bf16.mxu0 0
    %994 = vmatpush2.bf16.msra.mxu0 0
    %995 = vmatprep.subr.bf16.mxu0 0
    %996 = vmatpush2.bf16.msra.mxu0 0
    %997 = vmatprep.subr.bf16.mxu0 0
    %998 = vmatpush2.bf16.msra.mxu0 0
    %999 = vmatprep.subr.bf16.mxu0 0
    %1000 = vmatpush2.bf16.msra.mxu0 0
    %1001 = vmatprep.subr.bf16.mxu0 0
    %1002 = vmatpush2.bf16.msra.mxu0 0
    %1003 = vmatprep.mubr.bf16.mxu0 0
    %1004 = vmatmul.mubr.bf16.gmra.mxu0 %v314
    %v1005 = vpop.f32.mrf.mxu0
    %v1006 = vadd.f32 %v957, %v1005
    %v1007 = vpop.f32.mrf.mxu0
    %v1008 = vpop.f32.mrf.mxu0
    %v1009 = vadd.f32 %v960, %v1008
    %v1010 = vpop.f32.mrf.mxu0
    %1011 = vmatprep.mubr.bf16.mxu0 0
    %1012 = vmatmul.mubr.bf16.gmra.mxu0 %v317
    %v1013 = vpop.f32.mrf.mxu0
    %v1014 = vadd.f32 %v965, %v1013
    %v1015 = vpop.f32.mrf.mxu0
    %v1016 = vpop.f32.mrf.mxu0
    %v1017 = vadd.f32 %v968, %v1016
    %v1018 = vpop.f32.mrf.mxu0
    %1019 = vdwg.mxu0
    %v1020 = vmax.f32 %v904, 0.0
    %v1021 = vmax.f32 %v906, 0.0
    %v1022 = vmax.f32 %v1006, 0.0
    %v1023 = vmax.f32 %v908, 0.0
    %v1024 = vmax.f32 %v910, 0.0
    %v1025 = vmax.f32 %v1009, 0.0
    %v1026 = vmax.f32 %v914, 0.0
    %v1027 = vmax.f32 %v916, 0.0
    %v1028 = vmax.f32 %v1014, 0.0
    %v1029 = vmax.f32 %v918, 0.0
    %v1030 = vmax.f32 %v920, 0.0
    %v1031 = vmax.f32 %v1017, 0.0
    %v1032 = vpack.c.bf16 %v1023, %v1020
    %v1033 = vpack.c.bf16 %v1024, %v1021
    %v1034 = vpack.c.bf16 %v1025, %v1022
    %v1035 = vpack.c.bf16 %v1029, %v1026
    %v1036 = vpack.c.bf16 %v1030, %v1027
    %v1037 = vpack.c.bf16 %v1031, %v1028
    %v1038 = vld [vmem:[#allocation6 + $0xc] sm:$0xff]
    %v1039 = vld [vmem:[#allocation6 + $0x24] sm:$0xff]
    %v1040 = vld [vmem:[#allocation6 + $0x3c] sm:$0xff]
    %v1041 = vld [vmem:[#allocation6 + $0x54] sm:$0xff]
    %v1042 = vld [vmem:[#allocation6 + $0x6c] sm:$0xff]
    %v1043 = vld [vmem:[#allocation6 + $0x84] sm:$0xff]
    %v1044 = vld [vmem:[#allocation6 + $0x9c] sm:$0xff]
    %v1045 = vld [vmem:[#allocation6 + $0xb4] sm:$0xff]
    %v1046 = vld [vmem:[#allocation6 + $0xcc] sm:$0xff]
    %v1047 = vld [vmem:[#allocation6 + $0xe4] sm:$0xff]
    %v1048 = vld [vmem:[#allocation6 + $0xfc] sm:$0xff]
    %v1049 = vld [vmem:[#allocation6 + $0x114] sm:$0xff]
    %v1050 = vld [vmem:[#allocation6 + $0x12c] sm:$0xff]
    %v1051 = vld [vmem:[#allocation6 + $0x144] sm:$0xff]
    %v1052 = vld [vmem:[#allocation6 + $0x15c] sm:$0xff]
    %v1053 = vld [vmem:[#allocation6 + $0x174] sm:$0xff]
    %v1054 = vld [vmem:[#allocation6 + $0x18c] sm:$0xff]
    %v1055 = vld [vmem:[#allocation6 + $0x1a4] sm:$0xff]
    %v1056 = vld [vmem:[#allocation6 + $0x1bc] sm:$0xff]
    %v1057 = vld [vmem:[#allocation6 + $0x1d4] sm:$0xff]
    %v1058 = vld [vmem:[#allocation6 + $0x1ec] sm:$0xff]
    %v1059 = vld [vmem:[#allocation6 + $0x204] sm:$0xff]
    %v1060 = vld [vmem:[#allocation6 + $0x21c] sm:$0xff]
    %v1061 = vld [vmem:[#allocation6 + $0x234] sm:$0xff]
    %v1062 = vld [vmem:[#allocation6 + $0x24c] sm:$0xff]
    %v1063 = vld [vmem:[#allocation6 + $0x264] sm:$0xff]
    %v1064 = vld [vmem:[#allocation6 + $0x27c] sm:$0xff]
    %v1065 = vld [vmem:[#allocation6 + $0x294] sm:$0xff]
    %v1066 = vld [vmem:[#allocation6 + $0x2ac] sm:$0xff]
    %v1067 = vld [vmem:[#allocation6 + $0x2c4] sm:$0xff]
    %v1068 = vld [vmem:[#allocation6 + $0x2dc] sm:$0xff]
    %v1069 = vld [vmem:[#allocation6 + $0x2f4] sm:$0xff]
    %v1070 = vld [vmem:[#allocation6 + $0x30c] sm:$0xff]
    %v1071 = vld [vmem:[#allocation6 + $0x324] sm:$0xff]
    %v1072 = vld [vmem:[#allocation6 + $0x33c] sm:$0xff]
    %v1073 = vld [vmem:[#allocation6 + $0x354] sm:$0xff]
    %v1074 = vld [vmem:[#allocation6 + $0x36c] sm:$0xff]
    %v1075 = vld [vmem:[#allocation6 + $0x384] sm:$0xff]
    %v1076 = vld [vmem:[#allocation6 + $0x39c] sm:$0xff]
    %v1077 = vld [vmem:[#allocation6 + $0x3b4] sm:$0xff]
    %v1078 = vld [vmem:[#allocation6 + $0x3cc] sm:$0xff]
    %v1079 = vld [vmem:[#allocation6 + $0x3e4] sm:$0xff]
    %v1080 = vld [vmem:[#allocation6 + $0x3fc] sm:$0xff]
    %v1081 = vld [vmem:[#allocation6 + $0x414] sm:$0xff]
    %v1082 = vld [vmem:[#allocation6 + $0x42c] sm:$0xff]
    %v1083 = vld [vmem:[#allocation6 + $0x444] sm:$0xff]
    %v1084 = vld [vmem:[#allocation6 + $0x45c] sm:$0xff]
    %v1085 = vld [vmem:[#allocation6 + $0x474] sm:$0xff]
    %s1086 = scalar_lea.vmem [#allocation7], 2
    %v1087 = vld [vmem:[%s1086] ss:$8 sm:$0x3]
    %v1089 = vlaneseq
    %v1090 = vshrl.u32 %v1089, 7
    %v1091 = vsub.s32 0, %v1090
    %v1092 = vrot.slane %v1087, %v1091
    %v1093 = vlaneseq
    %v1094 = vshrl.u32 %v1093, 7
    %v1095 = vsub.s32 1, %v1094
    %v1096 = vrot.slane %v1087, %v1095
    %v1147 = vunpack.c.l.b16 %v1038
    %v1148 = vunpack.c.h.b16 %v1038
    %v1149 = vunpack.c.l.b16 %v1039
    %v1150 = vunpack.c.h.b16 %v1039
    %v1151 = vunpack.c.l.b16 %v1040
    %v1152 = vunpack.c.h.b16 %v1040
    %v1153 = vunpack.c.l.b16 %v1041
    %v1154 = vunpack.c.h.b16 %v1041
    %v1155 = vunpack.c.l.b16 %v1042
    %v1156 = vunpack.c.h.b16 %v1042
    %v1157 = vunpack.c.l.b16 %v1043
    %v1158 = vunpack.c.h.b16 %v1043
    %v1159 = vunpack.c.l.b16 %v1044
    %v1160 = vunpack.c.h.b16 %v1044
    %v1161 = vunpack.c.l.b16 %v1045
    %v1162 = vunpack.c.h.b16 %v1045
    %v1163 = vunpack.c.l.b16 %v1046
    %v1164 = vunpack.c.h.b16 %v1046
    %v1165 = vunpack.c.l.b16 %v1047
    %v1166 = vunpack.c.h.b16 %v1047
    %v1167 = vunpack.c.l.b16 %v1048
    %v1168 = vunpack.c.h.b16 %v1048
    %v1169 = vunpack.c.l.b16 %v1049
    %v1170 = vunpack.c.h.b16 %v1049
    %v1171 = vunpack.c.l.b16 %v1050
    %v1172 = vunpack.c.h.b16 %v1050
    %v1173 = vunpack.c.l.b16 %v1051
    %v1174 = vunpack.c.h.b16 %v1051
    %v1175 = vunpack.c.l.b16 %v1052
    %v1176 = vunpack.c.h.b16 %v1052
    %v1177 = vunpack.c.l.b16 %v1053
    %v1178 = vunpack.c.h.b16 %v1053
    %v1179 = vunpack.c.l.b16 %v1054
    %v1180 = vunpack.c.h.b16 %v1054
    %v1181 = vunpack.c.l.b16 %v1055
    %v1182 = vunpack.c.h.b16 %v1055
    %v1183 = vunpack.c.l.b16 %v1056
    %v1184 = vunpack.c.h.b16 %v1056
    %v1185 = vunpack.c.l.b16 %v1057
    %v1186 = vunpack.c.h.b16 %v1057
    %v1187 = vunpack.c.l.b16 %v1058
    %v1188 = vunpack.c.h.b16 %v1058
    %v1189 = vunpack.c.l.b16 %v1059
    %v1190 = vunpack.c.h.b16 %v1059
    %v1191 = vunpack.c.l.b16 %v1060
    %v1192 = vunpack.c.h.b16 %v1060
    %v1193 = vunpack.c.l.b16 %v1061
    %v1194 = vunpack.c.h.b16 %v1061
    %v1195 = vunpack.c.l.b16 %v1062
    %v1196 = vunpack.c.h.b16 %v1062
    %v1197 = vunpack.c.l.b16 %v1063
    %v1198 = vunpack.c.h.b16 %v1063
    %v1199 = vunpack.c.l.b16 %v1064
    %v1200 = vunpack.c.h.b16 %v1064
    %v1201 = vunpack.c.l.b16 %v1065
    %v1202 = vunpack.c.h.b16 %v1065
    %v1203 = vunpack.c.l.b16 %v1066
    %v1204 = vunpack.c.h.b16 %v1066
    %v1205 = vunpack.c.l.b16 %v1067
    %v1206 = vunpack.c.h.b16 %v1067
    %v1207 = vunpack.c.l.b16 %v1068
    %v1208 = vunpack.c.h.b16 %v1068
    %v1209 = vunpack.c.l.b16 %v1069
    %v1210 = vunpack.c.h.b16 %v1069
    %v1211 = vunpack.c.l.b16 %v1070
    %v1212 = vunpack.c.h.b16 %v1070
    %v1213 = vunpack.c.l.b16 %v1071
    %v1214 = vunpack.c.h.b16 %v1071
    %v1215 = vunpack.c.l.b16 %v1072
    %v1216 = vunpack.c.h.b16 %v1072
    %v1217 = vunpack.c.l.b16 %v1073
    %v1218 = vunpack.c.h.b16 %v1073
    %v1219 = vunpack.c.l.b16 %v1074
    %v1220 = vunpack.c.h.b16 %v1074
    %v1221 = vunpack.c.l.b16 %v1075
    %v1222 = vunpack.c.h.b16 %v1075
    %v1223 = vunpack.c.l.b16 %v1076
    %v1224 = vunpack.c.h.b16 %v1076
    %v1225 = vunpack.c.l.b16 %v1077
    %v1226 = vunpack.c.h.b16 %v1077
    %v1227 = vunpack.c.l.b16 %v1078
    %v1228 = vunpack.c.h.b16 %v1078
    %v1229 = vunpack.c.l.b16 %v1079
    %v1230 = vunpack.c.h.b16 %v1079
    %v1231 = vunpack.c.l.b16 %v1080
    %v1232 = vunpack.c.h.b16 %v1080
    %v1233 = vunpack.c.l.b16 %v1081
    %v1234 = vunpack.c.h.b16 %v1081
    %v1235 = vunpack.c.l.b16 %v1082
    %v1236 = vunpack.c.h.b16 %v1082
    %v1237 = vunpack.c.l.b16 %v1083
    %v1238 = vunpack.c.h.b16 %v1083
    %v1239 = vunpack.c.l.b16 %v1084
    %v1240 = vunpack.c.h.b16 %v1084
    %v1241 = vunpack.c.l.b16 %v1085
    %v1242 = vunpack.c.h.b16 %v1085
    %v1243 = vpack.c.b16 %v1149, %v1147
    %v1244 = vpack.c.b16 %v1150, %v1148
    %v1245 = vpack.c.b16 %v1153, %v1151
    %v1246 = vpack.c.b16 %v1154, %v1152
    %v1247 = vpack.c.b16 %v1157, %v1155
    %v1248 = vpack.c.b16 %v1158, %v1156
    %v1249 = vpack.c.b16 %v1161, %v1159
    %v1250 = vpack.c.b16 %v1162, %v1160
    %v1251 = vpack.c.b16 %v1165, %v1163
    %v1252 = vpack.c.b16 %v1166, %v1164
    %v1253 = vpack.c.b16 %v1169, %v1167
    %v1254 = vpack.c.b16 %v1170, %v1168
    %v1255 = vpack.c.b16 %v1173, %v1171
    %v1256 = vpack.c.b16 %v1174, %v1172
    %v1257 = vpack.c.b16 %v1177, %v1175
    %v1258 = vpack.c.b16 %v1178, %v1176
    %v1259 = vpack.c.b16 %v1181, %v1179
    %v1260 = vpack.c.b16 %v1182, %v1180
    %v1261 = vpack.c.b16 %v1185, %v1183
    %v1262 = vpack.c.b16 %v1186, %v1184
    %v1263 = vpack.c.b16 %v1189, %v1187
    %v1264 = vpack.c.b16 %v1190, %v1188
    %v1265 = vpack.c.b16 %v1193, %v1191
    %v1266 = vpack.c.b16 %v1194, %v1192
    %v1267 = vpack.c.b16 %v1197, %v1195
    %v1268 = vpack.c.b16 %v1198, %v1196
    %v1269 = vpack.c.b16 %v1201, %v1199
    %v1270 = vpack.c.b16 %v1202, %v1200
    %v1271 = vpack.c.b16 %v1205, %v1203
    %v1272 = vpack.c.b16 %v1206, %v1204
    %v1273 = vpack.c.b16 %v1209, %v1207
    %v1274 = vpack.c.b16 %v1210, %v1208
    %v1275 = vpack.c.b16 %v1213, %v1211
    %v1276 = vpack.c.b16 %v1214, %v1212
    %v1277 = vpack.c.b16 %v1217, %v1215
    %v1278 = vpack.c.b16 %v1218, %v1216
    %v1279 = vpack.c.b16 %v1221, %v1219
    %v1280 = vpack.c.b16 %v1222, %v1220
    %v1281 = vpack.c.b16 %v1225, %v1223
    %v1282 = vpack.c.b16 %v1226, %v1224
    %v1283 = vpack.c.b16 %v1229, %v1227
    %v1284 = vpack.c.b16 %v1230, %v1228
    %v1285 = vpack.c.b16 %v1233, %v1231
    %v1286 = vpack.c.b16 %v1234, %v1232
    %v1287 = vpack.c.b16 %v1237, %v1235
    %v1288 = vpack.c.b16 %v1238, %v1236
    %v1289 = vpack.c.b16 %v1241, %v1239
    %v1290 = vpack.c.b16 %v1242, %v1240
    %1339 = vmatprep.subr.bf16.mxu0 %v1258
    %1340 = vmatpush1.bf16.msra.mxu0 %v1257
    %1341 = vmatprep.subr.bf16.mxu0 %v1256
    %1342 = vmatpush1.bf16.msra.mxu0 %v1255
    %1343 = vmatprep.subr.bf16.mxu0 %v1254
    %1344 = vmatpush1.bf16.msra.mxu0 %v1253
    %1345 = vmatprep.subr.bf16.mxu0 %v1252
    %1346 = vmatpush1.bf16.msra.mxu0 %v1251
    %1347 = vmatprep.subr.bf16.mxu0 %v1250
    %1348 = vmatpush1.bf16.msra.mxu0 %v1249
    %1349 = vmatprep.subr.bf16.mxu0 %v1248
    %1350 = vmatpush1.bf16.msra.mxu0 %v1247
    %1351 = vmatprep.subr.bf16.mxu0 %v1246
    %1352 = vmatpush1.bf16.msra.mxu0 %v1245
    %1353 = vmatprep.subr.bf16.mxu0 %v1244
    %1354 = vmatpush1.bf16.msra.mxu0 %v1243
    %1355 = vmatprep.subr.bf16.mxu0 %v1274
    %1356 = vmatpush2.bf16.msra.mxu0 %v1273
    %1357 = vmatprep.subr.bf16.mxu0 %v1272
    %1358 = vmatpush2.bf16.msra.mxu0 %v1271
    %1359 = vmatprep.subr.bf16.mxu0 %v1270
    %1360 = vmatpush2.bf16.msra.mxu0 %v1269
    %1361 = vmatprep.subr.bf16.mxu0 %v1268
    %1362 = vmatpush2.bf16.msra.mxu0 %v1267
    %1363 = vmatprep.subr.bf16.mxu0 %v1266
    %1364 = vmatpush2.bf16.msra.mxu0 %v1265
    %1365 = vmatprep.subr.bf16.mxu0 %v1264
    %1366 = vmatpush2.bf16.msra.mxu0 %v1263
    %1367 = vmatprep.subr.bf16.mxu0 %v1262
    %1368 = vmatpush2.bf16.msra.mxu0 %v1261
    %1369 = vmatprep.subr.bf16.mxu0 %v1260
    %1370 = vmatpush2.bf16.msra.mxu0 %v1259
    %1371 = vmatprep.mubr.bf16.mxu0 %v1033
    %1372 = vmatmul.mubr.bf16.gmra.mxu0 %v1032
    %v1373 = vpop.f32.mrf.mxu0
    %v1374 = vadd.f32 %v1092, %v1373
    %v1375 = vpop.f32.mrf.mxu0
    %v1376 = vadd.f32 %v1096, %v1375
    %v1377 = vpop.f32.mrf.mxu0
    %v1378 = vadd.f32 %v1092, %v1377
    %v1379 = vpop.f32.mrf.mxu0
    %v1380 = vadd.f32 %v1096, %v1379
    %1381 = vmatprep.mubr.bf16.mxu0 %v1036
    %1382 = vmatmul.mubr.bf16.gmra.mxu0 %v1035
    %v1383 = vpop.f32.mrf.mxu0
    %v1384 = vadd.f32 %v1092, %v1383
    %v1385 = vpop.f32.mrf.mxu0
    %v1386 = vadd.f32 %v1096, %v1385
    %v1387 = vpop.f32.mrf.mxu0
    %v1388 = vadd.f32 %v1092, %v1387
    %v1389 = vpop.f32.mrf.mxu0
    %v1390 = vadd.f32 %v1096, %v1389
    %1391 = vdwg.mxu0
    %1392 = vmatprep.subr.bf16.mxu0 %v1290
    %1393 = vmatpush1.bf16.msra.mxu0 %v1289
    %1394 = vmatprep.subr.bf16.mxu0 %v1288
    %1395 = vmatpush1.bf16.msra.mxu0 %v1287
    %1396 = vmatprep.subr.bf16.mxu0 %v1286
    %1397 = vmatpush1.bf16.msra.mxu0 %v1285
    %1398 = vmatprep.subr.bf16.mxu0 %v1284
    %1399 = vmatpush1.bf16.msra.mxu0 %v1283
    %1400 = vmatprep.subr.bf16.mxu0 %v1282
    %1401 = vmatpush1.bf16.msra.mxu0 %v1281
    %1402 = vmatprep.subr.bf16.mxu0 %v1280
    %1403 = vmatpush1.bf16.msra.mxu0 %v1279
    %1404 = vmatprep.subr.bf16.mxu0 %v1278
    %1405 = vmatpush1.bf16.msra.mxu0 %v1277
    %1406 = vmatprep.subr.bf16.mxu0 %v1276
    %1407 = vmatpush1.bf16.msra.mxu0 %v1275
    %1408 = vmatprep.subr.bf16.mxu0 0
    %1409 = vmatpush2.bf16.msra.mxu0 0
    %1410 = vmatprep.subr.bf16.mxu0 0
    %1411 = vmatpush2.bf16.msra.mxu0 0
    %1412 = vmatprep.subr.bf16.mxu0 0
    %1413 = vmatpush2.bf16.msra.mxu0 0
    %1414 = vmatprep.subr.bf16.mxu0 0
    %1415 = vmatpush2.bf16.msra.mxu0 0
    %1416 = vmatprep.subr.bf16.mxu0 0
    %1417 = vmatpush2.bf16.msra.mxu0 0
    %1418 = vmatprep.subr.bf16.mxu0 0
    %1419 = vmatpush2.bf16.msra.mxu0 0
    %1420 = vmatprep.subr.bf16.mxu0 0
    %1421 = vmatpush2.bf16.msra.mxu0 0
    %1422 = vmatprep.subr.bf16.mxu0 0
    %1423 = vmatpush2.bf16.msra.mxu0 0
    %1424 = vmatprep.mubr.bf16.mxu0 0
    %1425 = vmatmul.mubr.bf16.gmra.mxu0 %v1034
    %v1426 = vpop.f32.mrf.mxu0
    %v1427 = vadd.f32 %v1374, %v1426
    %v1428 = vpop.f32.mrf.mxu0
    %v1429 = vadd.f32 %v1376, %v1428
    %v1430 = vpop.f32.mrf.mxu0
    %v1431 = vadd.f32 %v1378, %v1430
    %v1432 = vpop.f32.mrf.mxu0
    %v1433 = vadd.f32 %v1380, %v1432
    %1434 = vmatprep.mubr.bf16.mxu0 0
    %1435 = vmatmul.mubr.bf16.gmra.mxu0 %v1037
    %v1436 = vpop.f32.mrf.mxu0
    %v1437 = vadd.f32 %v1384, %v1436
    %v1438 = vpop.f32.mrf.mxu0
    %v1439 = vadd.f32 %v1386, %v1438
    %v1440 = vpop.f32.mrf.mxu0
    %v1441 = vadd.f32 %v1388, %v1440
    %v1442 = vpop.f32.mrf.mxu0
    %v1443 = vadd.f32 %v1390, %v1442
    %1444 = vdwg.mxu0
    %v1445 = vpack.c.bf16 %v1431, %v1427
    %v1446 = vpack.c.bf16 %v1433, %v1429
    %v1447 = vpack.c.bf16 %v1441, %v1437
    %v1448 = vpack.c.bf16 %v1443, %v1439
    %v1449 = vld [vmem:[#allocation6 + $0x14] sm:$0xf]
    %v1450 = vld [vmem:[#allocation6 + $0x2c] sm:$0xf]
    %v1451 = vld [vmem:[#allocation6 + $0x44] sm:$0xf]
    %v1452 = vld [vmem:[#allocation6 + $0x5c] sm:$0xf]
    %v1453 = vld [vmem:[#allocation6 + $0x74] sm:$0xf]
    %v1454 = vld [vmem:[#allocation6 + $0x8c] sm:$0xf]
    %v1455 = vld [vmem:[#allocation6 + $0xa4] sm:$0xf]
    %v1456 = vld [vmem:[#allocation6 + $0xbc] sm:$0xf]
    %v1457 = vld [vmem:[#allocation6 + $0xd4] sm:$0xf]
    %v1458 = vld [vmem:[#allocation6 + $0xec] sm:$0xf]
    %v1459 = vld [vmem:[#allocation6 + $0x104] sm:$0xf]
    %v1460 = vld [vmem:[#allocation6 + $0x11c] sm:$0xf]
    %v1461 = vld [vmem:[#allocation6 + $0x134] sm:$0xf]
    %v1462 = vld [vmem:[#allocation6 + $0x14c] sm:$0xf]
    %v1463 = vld [vmem:[#allocation6 + $0x164] sm:$0xf]
    %v1464 = vld [vmem:[#allocation6 + $0x17c] sm:$0xf]
    %v1465 = vld [vmem:[#allocation6 + $0x194] sm:$0xf]
    %v1466 = vld [vmem:[#allocation6 + $0x1ac] sm:$0xf]
    %v1467 = vld [vmem:[#allocation6 + $0x1c4] sm:$0xf]
    %v1468 = vld [vmem:[#allocation6 + $0x1dc] sm:$0xf]
    %v1469 = vld [vmem:[#allocation6 + $0x1f4] sm:$0xf]
    %v1470 = vld [vmem:[#allocation6 + $0x20c] sm:$0xf]
    %v1471 = vld [vmem:[#allocation6 + $0x224] sm:$0xf]
    %v1472 = vld [vmem:[#allocation6 + $0x23c] sm:$0xf]
    %v1473 = vld [vmem:[#allocation6 + $0x254] sm:$0xf]
    %v1474 = vld [vmem:[#allocation6 + $0x26c] sm:$0xf]
    %v1475 = vld [vmem:[#allocation6 + $0x284] sm:$0xf]
    %v1476 = vld [vmem:[#allocation6 + $0x29c] sm:$0xf]
    %v1477 = vld [vmem:[#allocation6 + $0x2b4] sm:$0xf]
    %v1478 = vld [vmem:[#allocation6 + $0x2cc] sm:$0xf]
    %v1479 = vld [vmem:[#allocation6 + $0x2e4] sm:$0xf]
    %v1480 = vld [vmem:[#allocation6 + $0x2fc] sm:$0xf]
    %v1481 = vld [vmem:[#allocation7 + $0x3] ss:$0 sm:$0xff]
    %v1514 = vunpack.c.l.b16 %v1449
    %v1515 = vunpack.c.l.b16 %v1450
    %v1516 = vunpack.c.l.b16 %v1451
    %v1517 = vunpack.c.l.b16 %v1452
    %v1518 = vunpack.c.l.b16 %v1453
    %v1519 = vunpack.c.l.b16 %v1454
    %v1520 = vunpack.c.l.b16 %v1455
    %v1521 = vunpack.c.l.b16 %v1456
    %v1522 = vunpack.c.l.b16 %v1457
    %v1523 = vunpack.c.l.b16 %v1458
    %v1524 = vunpack.c.l.b16 %v1459
    %v1525 = vunpack.c.l.b16 %v1460
    %v1526 = vunpack.c.l.b16 %v1461
    %v1527 = vunpack.c.l.b16 %v1462
    %v1528 = vunpack.c.l.b16 %v1463
    %v1529 = vunpack.c.l.b16 %v1464
    %v1530 = vunpack.c.l.b16 %v1465
    %v1531 = vunpack.c.l.b16 %v1466
    %v1532 = vunpack.c.l.b16 %v1467
    %v1533 = vunpack.c.l.b16 %v1468
    %v1534 = vunpack.c.l.b16 %v1469
    %v1535 = vunpack.c.l.b16 %v1470
    %v1536 = vunpack.c.l.b16 %v1471
    %v1537 = vunpack.c.l.b16 %v1472
    %v1538 = vunpack.c.l.b16 %v1473
    %v1539 = vunpack.c.l.b16 %v1474
    %v1540 = vunpack.c.l.b16 %v1475
    %v1541 = vunpack.c.l.b16 %v1476
    %v1542 = vunpack.c.l.b16 %v1477
    %v1543 = vunpack.c.l.b16 %v1478
    %v1544 = vunpack.c.l.b16 %v1479
    %v1545 = vunpack.c.l.b16 %v1480
    %v1546 = vpack.c.b16 %v1515, %v1514
    %v1547 = vpack.c.b16 %v1517, %v1516
    %v1548 = vpack.c.b16 %v1519, %v1518
    %v1549 = vpack.c.b16 %v1521, %v1520
    %v1550 = vpack.c.b16 %v1523, %v1522
    %v1551 = vpack.c.b16 %v1525, %v1524
    %v1552 = vpack.c.b16 %v1527, %v1526
    %v1553 = vpack.c.b16 %v1529, %v1528
    %v1554 = vpack.c.b16 %v1531, %v1530
    %v1555 = vpack.c.b16 %v1533, %v1532
    %v1556 = vpack.c.b16 %v1535, %v1534
    %v1557 = vpack.c.b16 %v1537, %v1536
    %v1558 = vpack.c.b16 %v1539, %v1538
    %v1559 = vpack.c.b16 %v1541, %v1540
    %v1560 = vpack.c.b16 %v1543, %v1542
    %v1561 = vpack.c.b16 %v1545, %v1544
    %1578 = vmatprep.subr.bf16.mxu0 0
    %1579 = vmatpush1.bf16.msra.mxu0 %v1553
    %1580 = vmatprep.subr.bf16.mxu0 0
    %1581 = vmatpush1.bf16.msra.mxu0 %v1552
    %1582 = vmatprep.subr.bf16.mxu0 0
    %1583 = vmatpush1.bf16.msra.mxu0 %v1551
    %1584 = vmatprep.subr.bf16.mxu0 0
    %1585 = vmatpush1.bf16.msra.mxu0 %v1550
    %1586 = vmatprep.subr.bf16.mxu0 0
    %1587 = vmatpush1.bf16.msra.mxu0 %v1549
    %1588 = vmatprep.subr.bf16.mxu0 0
    %1589 = vmatpush1.bf16.msra.mxu0 %v1548
    %1590 = vmatprep.subr.bf16.mxu0 0
    %1591 = vmatpush1.bf16.msra.mxu0 %v1547
    %1592 = vmatprep.subr.bf16.mxu0 0
    %1593 = vmatpush1.bf16.msra.mxu0 %v1546
    %1594 = vmatprep.subr.bf16.mxu0 0
    %1595 = vmatpush2.bf16.msra.mxu0 %v1561
    %1596 = vmatprep.subr.bf16.mxu0 0
    %1597 = vmatpush2.bf16.msra.mxu0 %v1560
    %1598 = vmatprep.subr.bf16.mxu0 0
    %1599 = vmatpush2.bf16.msra.mxu0 %v1559
    %1600 = vmatprep.subr.bf16.mxu0 0
    %1601 = vmatpush2.bf16.msra.mxu0 %v1558
    %1602 = vmatprep.subr.bf16.mxu0 0
    %1603 = vmatpush2.bf16.msra.mxu0 %v1557
    %1604 = vmatprep.subr.bf16.mxu0 0
    %1605 = vmatpush2.bf16.msra.mxu0 %v1556
    %1606 = vmatprep.subr.bf16.mxu0 0
    %1607 = vmatpush2.bf16.msra.mxu0 %v1555
    %1608 = vmatprep.subr.bf16.mxu0 0
    %1609 = vmatpush2.bf16.msra.mxu0 %v1554
    %1610 = vmatprep.mubr.bf16.mxu0 %v1446
    %1611 = vmatmul.mubr.bf16.gmra.mxu0 %v1445
    %v1612 = vpop.f32.mrf.mxu0
    %v1613 = vadd.f32 %v1481, %v1612
    %v1614 = vpop.f32.mrf.mxu0
    %v1615 = vpop.f32.mrf.mxu0
    %v1616 = vadd.f32 %v1481, %v1615
    %v1617 = vpop.f32.mrf.mxu0
    %1618 = vmatprep.mubr.bf16.mxu0 %v1448
    %1619 = vmatmul.mubr.bf16.gmra.mxu0 %v1447
    %v1620 = vpop.f32.mrf.mxu0
    %v1621 = vadd.f32 %v1481, %v1620
    %v1622 = vpop.f32.mrf.mxu0
    %v1623 = vpop.f32.mrf.mxu0
    %v1624 = vadd.f32 %v1481, %v1623
    %v1625 = vpop.f32.mrf.mxu0
    %1626 = vdwg.mxu0
    %v1627 = vmax.f32 %v1613, 0.0
    %v1628 = vmax.f32 %v1616, 0.0
    %v1629 = vmax.f32 %v1621, 0.0
    %v1630 = vmax.f32 %v1624, 0.0
    %v1631 = vld [vmem:[#allocation7 + $0x4] ss:$0 sm:$0xff]
    %v1632 = vmul.f32 %v1627, %v1631
    %v1633 = vmul.f32 %v1628, %v1631
    %v1634 = vmul.f32 %v1629, %v1631
    %v1635 = vmul.f32 %v1630, %v1631
    %1636 = vadd.xlane.f32.xlu0 %v1632
    %v1637 = vpop.xlane.xlu0 %1636
    %1638 = vadd.xlane.f32.xlu0 %v1633
    %v1639 = vpop.xlane.xlu0 %1638
    %1640 = vadd.xlane.f32.xlu0 %v1634
    %v1641 = vpop.xlane.xlu0 %1640
    %1642 = vadd.xlane.f32.xlu0 %v1635
    %v1643 = vpop.xlane.xlu0 %1642
    %v1644 = vld [vmem:[#allocation7 + $0x5] ss:$0 sm:$0xff]
    %v1645 = vadd.f32 %v1637, %v1644
    %v1646 = vadd.f32 %v1639, %v1644
    %v1647 = vadd.f32 %v1641, %v1644
    %v1648 = vadd.f32 %v1643, %v1644
    %vm1649 = vcmask 7168
    %1650 = vst.msk [vmem:[%s4] sm:$0xff] %vm1649, %v1645
    %1651 = vst.msk [vmem:[%s4 + $0x8] sm:$0xff] %vm1649, %v1646
    %1652 = vst.msk [vmem:[%s4 + $0x10] sm:$0xff] %vm1649, %v1647
    %1653 = vst.msk [vmem:[%s4 + $0x18] sm:$0xff] %vm1649, %v1648
    // Predicated region
    $region34: #{convnet_forward.1} parent=1 // pred_check
      _
    $region35: #{convnet_forward.1} parent=1 // pred_check_branch
      %1655 = sbr.rel (0) target = $region37
    $region36: #{convnet_forward.1} parent=1 // pred_region
      _
    $region37: #{convnet_forward.1} parent=1 // pred_fallthru
      _
    // Predicated region
    $region38: #{convnet_forward.1} parent=1 // pred_check
      _
    $region39: #{convnet_forward.1} parent=1 // pred_check_branch
      %1657 = sbr.rel (0) target = $region41
    $region40: #{convnet_forward.1} parent=1 // pred_region
      _
    $region41: #{convnet_forward.1} parent=1 // pred_fallthru
      _
    %1658 = vsyncpa [#allocation3], 1
    %1659 = vsyncpa [#allocation5], 1
    %1660 = vsyncpa [#allocation8], 1

</llo_original>
